<compile_context>
chip_gen: v6e
topology: v6e:2x2x1
jax: 0.10.0
libtpu: 0.0.40
codegen_flags: <defaults>
</compile_context>

<pallas_src>
import jax
import jax.numpy as jnp
from jax.experimental import pallas as pl
from jax.experimental.pallas import tpu as pltpu


# MXU input dtype (accumulation is always f32).  Set to jnp.float32 only if strict
# bit-parity with the f32 torch module is required (costs 2-4x MXU throughput).
_MATMUL_DTYPE = jnp.bfloat16
_LN_EPS = 1e-5


def _round_up(x, m):
    return ((x + m - 1) // m) * m


def _pick_m_tile(M, tm):
    """Pick an M tile <= ~tm (multiple of 8) that minimizes padding of M."""
    if M <= tm:
        return M
    n_tiles = -(-M // tm)
    return _round_up(-(-M // n_tiles), 8)


# ---- generation-dependent defaults (VMEM headroom + tile sizes) ----
def _vmem_capacity_bytes():
    try:
        return int(pltpu.get_tpu_info().vmem_capacity_bytes)
    except Exception:
        return 64 * 1024 * 1024  # conservative fallback (v7x per-TensorCore size)


_VMEM_CAP = _vmem_capacity_bytes()
# ~25% headroom for double-buffers / semaphores / compiler scratch.
_VMEM_LIMIT = min(_VMEM_CAP * 3 // 4, 96 * 1024 * 1024)
# Bigger tiles on 128-MiB-VMEM parts (v5e/v6e); 256 on v7x (64 MiB / TC).
_DEFAULT_TM = 512 if _VMEM_CAP >= 100 * 1024 * 1024 else 256
_DEFAULT_TN = _DEFAULT_TM


# ----------------------------- fused linear kernels -----------------------------
# y = act( LN(x) @ w + b ) + residual, optionally also emitting LN(x).

def _make_linear_kernel_single_k(*, has_ln, cache_ln, has_bias, activation,
                                 has_res, emit_ln):
    """Grid = (M tiles, N tiles); K is a single block — no accumulator round-trip."""

    def kernel(*refs):
        it = iter(refs)
        x_ref = next(it)
        w_ref = next(it)
        b_ref = next(it) if has_bias else None
        g_ref = next(it) if has_ln else None
        be_ref = next(it) if has_ln else None
        r_ref = next(it) if has_res else None
        o_ref = next(it)
        ln_out_ref = next(it) if emit_ln else None
        ln_scr = next(it) if cache_ln else None

        def _ln_rows():
            xv = x_ref[...].astype(jnp.float32)
            mu = jnp.mean(xv, axis=-1, keepdims=True)
            var = jnp.mean(jnp.square(xv - mu), axis=-1, keepdims=True)
            y = (xv - mu) * jax.lax.rsqrt(var + _LN_EPS)
            return y * g_ref[...].astype(jnp.float32) + be_ref[...].astype(jnp.float32)

        if has_ln and cache_ln:
            # Compute LN(x) once per M tile (j == 0) and reuse it for every N tile.
            @pl.when(pl.program_id(1) == 0)
            def _fill_ln_cache():
                y = _ln_rows()
                ln_scr[...] = y.astype(ln_scr.dtype)
                if emit_ln:
                    ln_out_ref[...] = y.astype(ln_out_ref.dtype)

            xin = ln_scr[...]
        elif has_ln:
            y = _ln_rows()
            if emit_ln:
                ln_out_ref[...] = y.astype(ln_out_ref.dtype)
            xin = y
        else:
            xin = x_ref[...]

        acc = jnp.dot(xin.astype(_MATMUL_DTYPE), w_ref[...].astype(_MATMUL_DTYPE),
                      preferred_element_type=jnp.float32)
        if has_bias:
            acc = acc + b_ref[...].astype(jnp.float32)
        if activation == "quickgelu":
            acc = acc * jax.nn.sigmoid(1.702 * acc)
        if has_res:
            acc = acc + r_ref[...].astype(jnp.float32)
        o_ref[...] = acc.astype(o_ref.dtype)

    return kernel


def _make_linear_kernel_multi_k(*, has_bias, activation, has_res):
    """Grid = (M tiles, N tiles, K tiles) with a VMEM f32 accumulator (no LN fusion)."""

    def kernel(*refs):
        it = iter(refs)
        x_ref = next(it)
        w_ref = next(it)
        b_ref = next(it) if has_bias else None
        r_ref = next(it) if has_res else None
        o_ref = next(it)
        acc_ref = next(it)

        k = pl.program_id(2)

        @pl.when(k == 0)
        def _init():
            acc_ref[...] = jnp.zeros_like(acc_ref)

        acc_ref[...] += jnp.dot(x_ref[...].astype(_MATMUL_DTYPE),
                                w_ref[...].astype(_MATMUL_DTYPE),
                                preferred_element_type=jnp.float32)

        @pl.when(k == pl.num_programs(2) - 1)
        def _finalize():
            y = acc_ref[...]
            if has_bias:
                y = y + b_ref[...].astype(jnp.float32)
            if activation == "quickgelu":
                y = y * jax.nn.sigmoid(1.702 * y)
            if has_res:
                y = y + r_ref[...].astype(jnp.float32)
            o_ref[...] = y.astype(o_ref.dtype)

    return kernel


def fused_linear(x, w, b=None, *, gamma=None, beta=None, activation=None,
                 residual=None, emit_ln=False, tm=None, tn=None, tk=None):
    """y = act( LN(x) @ w + b ) + residual.

    x: (M, K) f32 activations.  w: (K, N) weights already in compute layout and
    pre-cast to _MATMUL_DTYPE.  b: (N,) or None.  Optionally fuses a row
    LayerNorm(gamma, beta) of x, a QuickGELU epilogue and a residual add.
    emit_ln=True additionally returns LN(x) (the gcam_avt path) as a second output.
    """
    M, K = x.shape
    N = w.shape[1]
    has_ln = gamma is not None
    has_bias = b is not None
    has_res = residual is not None
    if emit_ln:
        assert has_ln
    tm = _DEFAULT_TM if tm is None else tm
    tn = _DEFAULT_TN if tn is None else tn

    tm_eff = _pick_m_tile(M, tm)
    Mp = _round_up(M, tm_eff)
    tn_eff = N if N <= tn else tn
    Np = _round_up(N, tn_eff)
    if has_ln or tk is None or tk >= K:
        tk_eff = K                       # LN fusion needs the whole row in one block
    else:
        tk_eff = tk
    Kp = _round_up(K, tk_eff)
    kt = Kp // tk_eff
    nj = Np // tn_eff
    cache_ln = has_ln and nj > 1         # avoid recomputing LN(x) for every N tile

    # Padding only materializes when a dimension isn't a tile multiple (never for the
    # toy shapes here; pre-pad the weights in prepare_params for big models).
    x2 = x if (Mp == M and Kp == K) else jnp.pad(x, ((0, Mp - M), (0, Kp - K)))
    w2 = w if (Kp == K and Np == N) else jnp.pad(w, ((0, Kp - K), (0, Np - N)))
    if has_bias:
        b2 = (b if Np == N else jnp.pad(b, (0, Np - N))).reshape(1, Np)
    if has_res:
        r2 = residual if (Mp == M and Np == N) else jnp.pad(
            residual, ((0, Mp - M), (0, Np - N)))

    cost = pl.CostEstimate(
        flops=2 * Mp * Kp * Np,
        transcendentals=(Mp * Np) if activation == "quickgelu" else 0,
        bytes_accessed=4 * Mp * Kp + int(w2.dtype.itemsize) * Kp * Np
        + 4 * Mp * Np * (2 if has_res else 1))

    if kt == 1:
        grid = (Mp // tm_eff, nj)
        in_specs = [pl.BlockSpec((tm_eff, Kp), lambda i, j: (i, 0)),
                    pl.BlockSpec((Kp, tn_eff), lambda i, j: (0, j))]
        args = [x2, w2]
        if has_bias:
            in_specs.append(pl.BlockSpec((1, tn_eff), lambda i, j: (0, j)))
            args.append(b2)
        if has_ln:
            in_specs += [pl.BlockSpec((1, Kp), lambda i, j: (0, 0)),
                         pl.BlockSpec((1, Kp), lambda i, j: (0, 0))]
            args += [gamma.reshape(1, K), beta.reshape(1, K)]
        if has_res:
            in_specs.append(pl.BlockSpec((tm_eff, tn_eff), lambda i, j: (i, j)))
            args.append(r2)

        out_specs = pl.BlockSpec((tm_eff, tn_eff), lambda i, j: (i, j))
        out_shape = jax.ShapeDtypeStruct((Mp, Np), x.dtype)
        if emit_ln:
            out_specs = (out_specs, pl.BlockSpec((tm_eff, Kp), lambda i, j: (i, 0)))
            out_shape = (out_shape, jax.ShapeDtypeStruct((Mp, Kp), x.dtype))

        scratch = [pltpu.VMEM((tm_eff, Kp), _MATMUL_DTYPE)] if cache_ln else []
        kernel = _make_linear_kernel_single_k(
            has_ln=has_ln, cache_ln=cache_ln, has_bias=has_bias,
            activation=activation, has_res=has_res, emit_ln=emit_ln)
        # j must be sequential when LN is cached / emitted once per M tile.
        semantics = ("parallel", "arbitrary" if has_ln else "parallel")
    else:
        grid = (Mp // tm_eff, nj, kt)
        in_specs = [pl.BlockSpec((tm_eff, tk_eff), lambda i, j, k: (i, k)),
                    pl.BlockSpec((tk_eff, tn_eff), lambda i, j, k: (k, j))]
        args = [x2, w2]
        if has_bias:
            in_specs.append(pl.BlockSpec((1, tn_eff), lambda i, j, k: (0, j)))
            args.append(b2)
        if has_res:
            in_specs.append(pl.BlockSpec((tm_eff, tn_eff), lambda i, j, k: (i, j)))
            args.append(r2)
        out_specs = pl.BlockSpec((tm_eff, tn_eff), lambda i, j, k: (i, j))
        out_shape = jax.ShapeDtypeStruct((Mp, Np), x.dtype)
        scratch = [pltpu.VMEM((tm_eff, tn_eff), jnp.float32)]
        kernel = _make_linear_kernel_multi_k(
            has_bias=has_bias, activation=activation, has_res=has_res)
        semantics = ("parallel", "parallel", "arbitrary")

    res = pl.pallas_call(
        kernel, out_shape=out_shape, grid=grid,
        in_specs=in_specs, out_specs=out_specs, scratch_shapes=scratch,
        compiler_params=pltpu.CompilerParams(
            dimension_semantics=semantics, vmem_limit_bytes=_VMEM_LIMIT),
        cost_estimate=cost,
    )(*args)

    if emit_ln:
        out, ln_out = res
    else:
        out = res
    if Mp != M or Np != N:
        out = out[:M, :N]
    if emit_ln:
        if Mp != M:                       # Kp == K whenever has_ln
            ln_out = ln_out[:M, :]
        return out, ln_out
    return out


# ----------------------------- standalone LayerNorm -----------------------------
# Only needed where the LN output itself is the residual stream (ln_pre).

def _layernorm_kernel(x_ref, g_ref, b_ref, o_ref):
    x = x_ref[...].astype(jnp.float32)
    mu = jnp.mean(x, axis=-1, keepdims=True)
    var = jnp.mean(jnp.square(x - mu), axis=-1, keepdims=True)
    y = (x - mu) * jax.lax.rsqrt(var + _LN_EPS)
    o_ref[...] = (y * g_ref[...].astype(jnp.float32)
                  + b_ref[...].astype(jnp.float32)).astype(o_ref.dtype)


def pallas_layernorm(x, g, b, *, tm=None):
    M, D = x.shape
    tm = _DEFAULT_TM if tm is None else tm
    tm_eff = _pick_m_tile(M, tm)
    Mp = _round_up(M, tm_eff)
    xp = x if Mp == M else jnp.pad(x, ((0, Mp - M), (0, 0)))
    out = pl.pallas_call(
        _layernorm_kernel,
        out_shape=jax.ShapeDtypeStruct((Mp, D), x.dtype),
        grid=(Mp // tm_eff,),
        in_specs=[pl.BlockSpec((tm_eff, D), lambda i: (i, 0)),
                  pl.BlockSpec((1, D), lambda i: (0, 0)),
                  pl.BlockSpec((1, D), lambda i: (0, 0))],
        out_specs=pl.BlockSpec((tm_eff, D), lambda i: (i, 0)),
        compiler_params=pltpu.CompilerParams(dimension_semantics=("parallel",),
                                             vmem_limit_bytes=_VMEM_LIMIT),
    )(xp, g.reshape(1, D), b.reshape(1, D))
    return out[:M] if Mp != M else out


# ----------------------------- attention -----------------------------
# Consumes the packed qkv projection (torch MHA layout: [q | k | v] along the last
# dim).  Each head writes its output directly into its lane slice of o_ref (no big
# concat), softmax is exact f32 (att_weights rows sum to 1), matmuls run in bf16
# with f32 accumulation.

def _make_attn_kernel(heads, hd, scale):
    D = heads * hd

    def kernel(qkv_ref, o_ref, w_ref):
        qkv = qkv_ref[0]                                   # (L, 3D) f32
        L = qkv.shape[0]
        p_sum = jnp.zeros((L, L), jnp.float32)
        for h in range(heads):                             # static unroll over heads
            q = (qkv[:, h * hd:(h + 1) * hd].astype(jnp.float32)
                 * scale).astype(_MATMUL_DTYPE)
            k = qkv[:, D + h * hd:D + (h + 1) * hd].astype(_MATMUL_DTYPE)
            v = qkv[:, 2 * D + h * hd:2 * D + (h + 1) * hd].astype(_MATMUL_DTYPE)
            s = jax.lax.dot_general(q, k, (((1,), (1,)), ((), ())),
                                    preferred_element_type=jnp.float32)
            s = s - jnp.max(s, axis=-1, keepdims=True)
            e = jnp.exp(s)
            p = e / jnp.sum(e, axis=-1, keepdims=True)     # exact divide
            o_h = jnp.dot(p.astype(_MATMUL_DTYPE), v,
                          preferred_element_type=jnp.float32)
            o_ref[0, :, h * hd:(h + 1) * hd] = o_h.astype(o_ref.dtype)
            p_sum = p_sum + p
        w_ref[0] = (p_sum * (1.0 / heads)).astype(w_ref.dtype)

    return kernel


def pallas_attention(qkv, heads):
    """qkv: (N, L, 3D) -> (attn_out (N, L, D), head-averaged attn_weights (N, L, L))."""
    N, L, D3 = qkv.shape
    D = D3 // 3
    hd = D // heads
    scale = 1.0 / float(hd) ** 0.5
    cost = pl.CostEstimate(flops=4 * N * heads * L * L * hd,
                           transcendentals=N * heads * L * L,
                           bytes_accessed=4 * (N * L * D3 + N * L * D + N * L * L))
    # Note: batch-only grid; on v7x a (N, head_pair) grid would give the 2 TCs more
    # parallel work for small batches (left out — toy head dims break the lane rule).
    return pl.pallas_call(
        _make_attn_kernel(heads, hd, scale),
        out_shape=(jax.ShapeDtypeStruct((N, L, D), qkv.dtype),
                   jax.ShapeDtypeStruct((N, L, L), qkv.dtype)),
        grid=(N,),
        in_specs=[pl.BlockSpec((1, L, D3), lambda bb: (bb, 0, 0))],
        out_specs=(pl.BlockSpec((1, L, D), lambda bb: (bb, 0, 0)),
                   pl.BlockSpec((1, L, L), lambda bb: (bb, 0, 0))),
        compiler_params=pltpu.CompilerParams(dimension_semantics=("parallel",),
                                             vmem_limit_bytes=_VMEM_LIMIT),
        cost_estimate=cost,
    )(qkv)


# ----------------------------- parameters -----------------------------

def init_params(key, *, in_ch=3, width=32, patch=8, image=16, heads=4,
                layers=2, out_dim=16):
    emb_h = emb_w = image // patch
    L = emb_h * emb_w + 1
    keys = iter(jax.random.split(key, 64))

    def norm(shape, std=0.02):
        return jax.random.normal(next(keys), shape, jnp.float32) * std

    params = dict(
        conv1_w=norm((width, in_ch, patch, patch)),   # Conv2d(3, width, patch, stride=patch, bias=False)
        class_embedding=norm((width,)),
        positional_embedding=norm((L, width)),
        ln_pre_g=jnp.ones((width,), jnp.float32),
        ln_pre_b=jnp.zeros((width,), jnp.float32),
        ln_post_g=jnp.ones((width,), jnp.float32),
        ln_post_b=jnp.zeros((width,), jnp.float32),
        proj=norm((width, out_dim)),
        blocks=[],
    )
    for _ in range(layers):
        params['blocks'].append(dict(
            ln1_g=jnp.ones((width,), jnp.float32),
            ln1_b=jnp.zeros((width,), jnp.float32),
            in_proj_w=norm((3 * width, width)),       # torch MultiheadAttention layout
            in_proj_b=norm((3 * width,)),
            out_proj_w=norm((width, width)),
            out_proj_b=norm((width,)),
            ln2_g=jnp.ones((width,), jnp.float32),
            ln2_b=jnp.zeros((width,), jnp.float32),
            c_fc_w=norm((4 * width, width)),
            c_fc_b=norm((4 * width,)),
            c_proj_w=norm((width, 4 * width)),
            c_proj_b=norm((width,)),
        ))
    cfg = dict(in_ch=in_ch, width=width, patch=patch, image=image, heads=heads,
               layers=layers, out_dim=out_dim, emb_h=emb_h, emb_w=emb_w, L=L)
    return params, cfg


def prepare_params(params):
    """Pre-transpose weights ONCE to (K, N) compute layout and pre-cast them to the
    MXU input dtype (bf16); biases and LN params stay f32."""
    p = dict(params)
    width = params['conv1_w'].shape[0]
    p['conv1_w_flat'] = params['conv1_w'].reshape(width, -1).T.astype(_MATMUL_DTYPE)
    p['proj_kn'] = params['proj'].astype(_MATMUL_DTYPE)            # already (K, N)
    blocks = []
    for blk in params['blocks']:
        nb = dict(blk)
        nb['in_proj_wT'] = blk['in_proj_w'].T.astype(_MATMUL_DTYPE)    # (D, 3D)
        nb['out_proj_wT'] = blk['out_proj_w'].T.astype(_MATMUL_DTYPE)  # (D, D)
        nb['c_fc_wT'] = blk['c_fc_w'].T.astype(_MATMUL_DTYPE)          # (D, 4D)
        nb['c_proj_wT'] = blk['c_proj_w'].T.astype(_MATMUL_DTYPE)      # (4D, D)
        blocks.append(nb)
    p['blocks'] = blocks
    return p


# ----------------------------- forward -----------------------------

def get_ln1_forward(params, cfg, x):
    # x is NCHW float32 (clip_model.dtype := float32 here).
    N, C, H, W = x.shape
    patch, width, heads = cfg['patch'], cfg['width'], cfg['heads']
    emb_h, emb_w = H // patch, W // patch
    P = emb_h * emb_w
    D = width

    # ---- run_stem: conv1 (stride=patch, no bias) as im2col + fused matmul ----
    patches = x.reshape(N, C, emb_h, patch, emb_w, patch)
    patches = patches.transpose(0, 2, 4, 1, 3, 5).reshape(N * P, C * patch * patch)
    x_emb = fused_linear(patches, params['conv1_w_flat']).reshape(N, P, width)

    cls = jnp.broadcast_to(params['class_embedding'].reshape(1, 1, width), (N, 1, width))
    x_seq = jnp.concatenate([cls, x_emb], axis=1)                 # (N, L, D)
    x_seq = x_seq + params['positional_embedding'][None]          # adaptive_pos_emb=False path
    L = x_seq.shape[1]
    x_flat = pallas_layernorm(x_seq.reshape(N * L, D),
                              params['ln_pre_g'], params['ln_pre_b'])   # residual stream

    # ---- run_trans ----
    att_weights = []
    gcam_avt = None
    n_layers = cfg['layers']
    for i, blk in enumerate(params['blocks']):
        last = (i == n_layers - 1)
        if last:
            # Last block: ln_1 is fused into the qkv projection AND emitted (gcam_avt).
            qkv, x_ln = fused_linear(x_flat, blk['in_proj_wT'], blk['in_proj_b'],
                                     gamma=blk['ln1_g'], beta=blk['ln1_b'],
                                     emit_ln=True)
            gcam_avt = x_ln.reshape(N, L, D).transpose(1, 0, 2)   # (L, N, D), like torch
        else:
            qkv = fused_linear(x_flat, blk['in_proj_wT'], blk['in_proj_b'],
                               gamma=blk['ln1_g'], beta=blk['ln1_b'])

        attn_o, att_w = pallas_attention(qkv.reshape(N, L, 3 * D), heads)
        att_weights.append(att_w)                                  # (N, L, L)

        # out_proj with the residual add fused into the epilogue.
        x_flat = fused_linear(attn_o.reshape(N * L, D), blk['out_proj_wT'],
                              blk['out_proj_b'], residual=x_flat)

        # MLP: ln_2 + c_fc + QuickGELU fused; c_proj + residual fused.
        h = fused_linear(x_flat, blk['c_fc_wT'], blk['c_fc_b'],
                         gamma=blk['ln2_g'], beta=blk['ln2_b'], activation='quickgelu')
        x_flat = fused_linear(h, blk['c_proj_wT'], blk['c_proj_b'], residual=x_flat)

    # ---- run_post: ln_post fused into one lane-dense projection over all N*L rows ----
    out_dim = cfg['out_dim']
    proj_all = fused_linear(x_flat, params['proj_kn'],
                            gamma=params['ln_post_g'], beta=params['ln_post_b'])
    proj_all = proj_all.reshape(N, L, out_dim)
    cls_emb = proj_all[:, 0, :]
    patch_emb = proj_all[:, 1:, :]
    # torch: img_emb = mean(ln_post(x)[:,1:]) @ proj == mean(ln_post(x)[:,1:] @ proj)
    # (projection is linear, so it commutes with the mean).  Tiny reduction -> plain XLA.
    img_emb = jnp.mean(patch_emb, axis=1)

    return dict(emb_h=emb_h, emb_w=emb_w, att_weights=att_weights, gcam_avt=gcam_avt,
                cls_emb=cls_emb, patch_emb=patch_emb, img_emb=img_emb)


# ----------------------------- main -----------------------------

if __name__ == "__main__":
    key = jax.random.PRNGKey(0)
    pkey, xkey = jax.random.split(key)
    params, cfg = init_params(pkey)
    params = prepare_params(params)   # one-time weight transpose + bf16 cast

    N = 2
    x = jax.random.normal(xkey, (N, cfg['in_ch'], cfg['image'], cfg['image']), jnp.float32)

    fwd = jax.jit(lambda p, xx: get_ln1_forward(p, cfg, xx))
    out = fwd(params, x)
    jax.block_until_ready(out)

    P = cfg['emb_h'] * cfg['emb_w']
    assert out['cls_emb'].shape == (N, cfg['out_dim'])
    assert out['patch_emb'].shape == (N, P, cfg['out_dim'])
    assert out['img_emb'].shape == (N, cfg['out_dim'])
    assert out['gcam_avt'].shape == (cfg['L'], N, cfg['width'])
    assert len(out['att_weights']) == cfg['layers']
    assert all(w.shape == (N, cfg['L'], cfg['L']) for w in out['att_weights'])
    # Softmax is exact f32 -> head-averaged attention rows sum to 1.
    for w in out['att_weights']:
        assert bool(jnp.allclose(jnp.sum(w, axis=-1), 1.0, atol=1e-3))
    assert all(bool(jnp.isfinite(v).all()) for v in
               [out['cls_emb'], out['patch_emb'], out['img_emb'], out['gcam_avt']])
    print("KERNEL_OK")
</pallas_src>

<mosaic_0001>
module attributes {stable_mosaic.version = 11 : i64} {
  func.func @_layernorm_kernel(%arg0: i32, %arg1: memref<10x32xf32, #tpu.memory_space<vmem>>, %arg2: memref<1x32xf32, #tpu.memory_space<vmem>>, %arg3: memref<1x32xf32, #tpu.memory_space<vmem>>, %arg4: memref<10x32xf32, #tpu.memory_space<vmem>>) attributes {dimension_semantics = [#tpu.dimension_semantics<parallel>], iteration_bounds = array<i64: 1>, scalar_prefetch = 0 : i64, scratch_operands = 0 : i64, tpu.core_type = #tpu.core_type<tc>, window_params = [{transform_indices = @transform_0, window_bounds = array<i64: 10, 32>}, {pipeline_mode = #tpu.pipeline_mode<synchronous>, transform_indices = @transform_1, window_bounds = array<i64: 1, 32>}, {pipeline_mode = #tpu.pipeline_mode<synchronous>, transform_indices = @transform_2, window_bounds = array<i64: 1, 32>}, {transform_indices = @transform_3, window_bounds = array<i64: 10, 32>}]} {
    %c0 = arith.constant 0 : index
    %c0_0 = arith.constant 0 : index
    %0 = vector.load %arg1[%c0, %c0_0] : memref<10x32xf32, #tpu.memory_space<vmem>>, vector<10x32xf32>
    %cst = arith.constant dense<0.000000e+00> : vector<10xf32>
    %1 = vector.multi_reduction <add>, %0, %cst [1] : vector<10x32xf32> to vector<10xf32>
    %2 = vector.shape_cast %1 : vector<10xf32> to vector<10x1xf32>
    %cst_1 = arith.constant 3.200000e+01 : f32
    %3 = vector.broadcast %cst_1 : f32 to vector<10x1xf32>
    %4 = arith.divf %2, %3 : vector<10x1xf32>
    %5 = vector.broadcast %4 : vector<10x1xf32> to vector<10x32xf32>
    %6 = arith.subf %0, %5 : vector<10x32xf32>
    %7 = arith.mulf %6, %6 : vector<10x32xf32>
    %cst_2 = arith.constant dense<0.000000e+00> : vector<10xf32>
    %8 = vector.multi_reduction <add>, %7, %cst_2 [1] : vector<10x32xf32> to vector<10xf32>
    %9 = vector.shape_cast %8 : vector<10xf32> to vector<10x1xf32>
    %cst_3 = arith.constant 3.200000e+01 : f32
    %10 = vector.broadcast %cst_3 : f32 to vector<10x1xf32>
    %11 = arith.divf %9, %10 : vector<10x1xf32>
    %12 = vector.broadcast %4 : vector<10x1xf32> to vector<10x32xf32>
    %13 = arith.subf %0, %12 : vector<10x32xf32>
    %cst_4 = arith.constant 9.99999974E-6 : f32
    %14 = vector.broadcast %cst_4 : f32 to vector<10x1xf32>
    %15 = arith.addf %11, %14 : vector<10x1xf32>
    %16 = math.rsqrt %15 : vector<10x1xf32>
    %17 = vector.broadcast %16 : vector<10x1xf32> to vector<10x32xf32>
    %18 = arith.mulf %13, %17 : vector<10x32xf32>
    %c0_5 = arith.constant 0 : index
    %c0_6 = arith.constant 0 : index
    %19 = vector.load %arg2[%c0_5, %c0_6] : memref<1x32xf32, #tpu.memory_space<vmem>>, vector<1x32xf32>
    %20 = vector.broadcast %19 : vector<1x32xf32> to vector<10x32xf32>
    %21 = arith.mulf %18, %20 : vector<10x32xf32>
    %c0_7 = arith.constant 0 : index
    %c0_8 = arith.constant 0 : index
    %22 = vector.load %arg3[%c0_7, %c0_8] : memref<1x32xf32, #tpu.memory_space<vmem>>, vector<1x32xf32>
    %23 = vector.broadcast %22 : vector<1x32xf32> to vector<10x32xf32>
    %24 = arith.addf %21, %23 : vector<10x32xf32>
    %c0_9 = arith.constant 0 : index
    %c0_10 = arith.constant 0 : index
    %25 = vector.load %arg4[%c0_9, %c0_10] : memref<10x32xf32, #tpu.memory_space<vmem>>, vector<10x32xf32>
    tpu.vector_store %arg4[%c0_9, %c0_10], %24 {strides = array<i32>} : memref<10x32xf32, #tpu.memory_space<vmem>>, vector<10x32xf32>,
    return
  }
  func.func @transform_0(%arg0: i32) -> (i32, i32) {
    %c0_i32 = arith.constant 0 : i32
    %c0_i32_0 = arith.constant 0 : i32
    return %arg0, %c0_i32 : i32, i32
  }
  func.func @transform_1(%arg0: i32) -> (i32, i32) {
    %c0_i32 = arith.constant 0 : i32
    %c0_i32_0 = arith.constant 0 : i32
    %c0_i32_1 = arith.constant 0 : i32
    return %c0_i32, %c0_i32_0 : i32, i32
  }
  func.func @transform_2(%arg0: i32) -> (i32, i32) {
    %c0_i32 = arith.constant 0 : i32
    %c0_i32_0 = arith.constant 0 : i32
    %c0_i32_1 = arith.constant 0 : i32
    return %c0_i32, %c0_i32_0 : i32, i32
  }
  func.func @transform_3(%arg0: i32) -> (i32, i32) {
    %c0_i32 = arith.constant 0 : i32
    %c0_i32_0 = arith.constant 0 : i32
    return %arg0, %c0_i32 : i32, i32
  }
}

module attributes {stable_mosaic.version = 11 : i64} {
  func.func @kernel(%arg0: i32, %arg1: i32, %arg2: memref<8x192xf32, #tpu.memory_space<vmem>>, %arg3: memref<192x32xbf16, #tpu.memory_space<vmem>>, %arg4: memref<8x32xf32, #tpu.memory_space<vmem>>) attributes {dimension_semantics = [#tpu.dimension_semantics<parallel>, #tpu.dimension_semantics<parallel>], iteration_bounds = array<i64: 1, 1>, scalar_prefetch = 0 : i64, scratch_operands = 0 : i64, tpu.core_type = #tpu.core_type<tc>, window_params = [{transform_indices = @transform_0, window_bounds = array<i64: 8, 192>}, {transform_indices = @transform_1, window_bounds = array<i64: 192, 32>}, {transform_indices = @transform_2, window_bounds = array<i64: 8, 32>}]} {
    %c0 = arith.constant 0 : index
    %c0_0 = arith.constant 0 : index
    %0 = vector.load %arg2[%c0, %c0_0] : memref<8x192xf32, #tpu.memory_space<vmem>>, vector<8x192xf32>
    %1 = arith.truncf %0 : vector<8x192xf32> to vector<8x192xbf16>
    %c0_1 = arith.constant 0 : index
    %c0_2 = arith.constant 0 : index
    %2 = vector.load %arg3[%c0_1, %c0_2] : memref<192x32xbf16, #tpu.memory_space<vmem>>, vector<192x32xbf16>
    %cst = arith.constant dense<0.000000e+00> : vector<8x32xf32>
    %3 = tpu.matmul %1, %2, %cst {dimension_numbers = #tpu.dot_dimension_numbers<[1], [0], [0], [1], [0, 0, 1, 1], [], []>} : vector<8x192xbf16>, vector<192x32xbf16>, vector<8x32xf32> -> vector<8x32xf32>
    %c0_3 = arith.constant 0 : index
    %c0_4 = arith.constant 0 : index
    %4 = vector.load %arg4[%c0_3, %c0_4] : memref<8x32xf32, #tpu.memory_space<vmem>>, vector<8x32xf32>
    tpu.vector_store %arg4[%c0_3, %c0_4], %3 {strides = array<i32>} : memref<8x32xf32, #tpu.memory_space<vmem>>, vector<8x32xf32>,
    return
  }
  func.func @transform_0(%arg0: i32, %arg1: i32) -> (i32, i32) {
    %c0_i32 = arith.constant 0 : i32
    %c0_i32_0 = arith.constant 0 : i32
    return %arg0, %c0_i32 : i32, i32
  }
  func.func @transform_1(%arg0: i32, %arg1: i32) -> (i32, i32) {
    %c0_i32 = arith.constant 0 : i32
    %c0_i32_0 = arith.constant 0 : i32
    return %c0_i32, %arg1 : i32, i32
  }
  func.func @transform_2(%arg0: i32, %arg1: i32) -> (i32, i32) {
    %c0_i32 = arith.constant 0 : i32
    return %arg0, %arg1 : i32, i32
  }
}

module attributes {stable_mosaic.version = 11 : i64} {
  func.func @kernel(%arg0: i32, %arg1: i32, %arg2: memref<10x32xf32, #tpu.memory_space<vmem>>, %arg3: memref<32x96xbf16, #tpu.memory_space<vmem>>, %arg4: memref<1x96xf32, #tpu.memory_space<vmem>>, %arg5: memref<1x32xf32, #tpu.memory_space<vmem>>, %arg6: memref<1x32xf32, #tpu.memory_space<vmem>>, %arg7: memref<10x96xf32, #tpu.memory_space<vmem>>) attributes {dimension_semantics = [#tpu.dimension_semantics<parallel>, #tpu.dimension_semantics<arbitrary>], iteration_bounds = array<i64: 1, 1>, scalar_prefetch = 0 : i64, scratch_operands = 0 : i64, tpu.core_type = #tpu.core_type<tc>, window_params = [{transform_indices = @transform_0, window_bounds = array<i64: 10, 32>}, {transform_indices = @transform_1, window_bounds = array<i64: 32, 96>}, {transform_indices = @transform_2, window_bounds = array<i64: 1, 96>}, {pipeline_mode = #tpu.pipeline_mode<synchronous>, transform_indices = @transform_3, window_bounds = array<i64: 1, 32>}, {pipeline_mode = #tpu.pipeline_mode<synchronous>, transform_indices = @transform_4, window_bounds = array<i64: 1, 32>}, {transform_indices = @transform_5, window_bounds = array<i64: 10, 96>}]} {
    %c0 = arith.constant 0 : index
    %c0_0 = arith.constant 0 : index
    %0 = vector.load %arg2[%c0, %c0_0] : memref<10x32xf32, #tpu.memory_space<vmem>>, vector<10x32xf32>
    %cst = arith.constant dense<0.000000e+00> : vector<10xf32>
    %1 = vector.multi_reduction <add>, %0, %cst [1] : vector<10x32xf32> to vector<10xf32>
    %2 = vector.shape_cast %1 : vector<10xf32> to vector<10x1xf32>
    %cst_1 = arith.constant 3.200000e+01 : f32
    %3 = vector.broadcast %cst_1 : f32 to vector<10x1xf32>
    %4 = arith.divf %2, %3 : vector<10x1xf32>
    %5 = vector.broadcast %4 : vector<10x1xf32> to vector<10x32xf32>
    %6 = arith.subf %0, %5 : vector<10x32xf32>
    %7 = arith.mulf %6, %6 : vector<10x32xf32>
    %cst_2 = arith.constant dense<0.000000e+00> : vector<10xf32>
    %8 = vector.multi_reduction <add>, %7, %cst_2 [1] : vector<10x32xf32> to vector<10xf32>
    %9 = vector.shape_cast %8 : vector<10xf32> to vector<10x1xf32>
    %cst_3 = arith.constant 3.200000e+01 : f32
    %10 = vector.broadcast %cst_3 : f32 to vector<10x1xf32>
    %11 = arith.divf %9, %10 : vector<10x1xf32>
    %12 = vector.broadcast %4 : vector<10x1xf32> to vector<10x32xf32>
    %13 = arith.subf %0, %12 : vector<10x32xf32>
    %cst_4 = arith.constant 9.99999974E-6 : f32
    %14 = vector.broadcast %cst_4 : f32 to vector<10x1xf32>
    %15 = arith.addf %11, %14 : vector<10x1xf32>
    %16 = math.rsqrt %15 : vector<10x1xf32>
    %17 = vector.broadcast %16 : vector<10x1xf32> to vector<10x32xf32>
    %18 = arith.mulf %13, %17 : vector<10x32xf32>
    %c0_5 = arith.constant 0 : index
    %c0_6 = arith.constant 0 : index
    %19 = vector.load %arg5[%c0_5, %c0_6] : memref<1x32xf32, #tpu.memory_space<vmem>>, vector<1x32xf32>
    %20 = vector.broadcast %19 : vector<1x32xf32> to vector<10x32xf32>
    %21 = arith.mulf %18, %20 : vector<10x32xf32>
    %c0_7 = arith.constant 0 : index
    %c0_8 = arith.constant 0 : index
    %22 = vector.load %arg6[%c0_7, %c0_8] : memref<1x32xf32, #tpu.memory_space<vmem>>, vector<1x32xf32>
    %23 = vector.broadcast %22 : vector<1x32xf32> to vector<10x32xf32>
    %24 = arith.addf %21, %23 : vector<10x32xf32>
    %25 = arith.truncf %24 : vector<10x32xf32> to vector<10x32xbf16>
    %c0_9 = arith.constant 0 : index
    %c0_10 = arith.constant 0 : index
    %26 = vector.load %arg3[%c0_9, %c0_10] : memref<32x96xbf16, #tpu.memory_space<vmem>>, vector<32x96xbf16>
    %cst_11 = arith.constant dense<0.000000e+00> : vector<10x96xf32>
    %27 = tpu.matmul %25, %26, %cst_11 {dimension_numbers = #tpu.dot_dimension_numbers<[1], [0], [0], [1], [0, 0, 1, 1], [], []>} : vector<10x32xbf16>, vector<32x96xbf16>, vector<10x96xf32> -> vector<10x96xf32>
    %c0_12 = arith.constant 0 : index
    %c0_13 = arith.constant 0 : index
    %28 = vector.load %arg4[%c0_12, %c0_13] : memref<1x96xf32, #tpu.memory_space<vmem>>, vector<1x96xf32>
    %29 = vector.broadcast %28 : vector<1x96xf32> to vector<10x96xf32>
    %30 = arith.addf %27, %29 : vector<10x96xf32>
    %c0_14 = arith.constant 0 : index
    %c0_15 = arith.constant 0 : index
    %31 = vector.load %arg7[%c0_14, %c0_15] : memref<10x96xf32, #tpu.memory_space<vmem>>, vector<10x96xf32>
    tpu.vector_store %arg7[%c0_14, %c0_15], %30 {strides = array<i32>} : memref<10x96xf32, #tpu.memory_space<vmem>>, vector<10x96xf32>,
    return
  }
  func.func @transform_0(%arg0: i32, %arg1: i32) -> (i32, i32) {
    %c0_i32 = arith.constant 0 : i32
    %c0_i32_0 = arith.constant 0 : i32
    return %arg0, %c0_i32 : i32, i32
  }
  func.func @transform_1(%arg0: i32, %arg1: i32) -> (i32, i32) {
    %c0_i32 = arith.constant 0 : i32
    %c0_i32_0 = arith.constant 0 : i32
    return %c0_i32, %arg1 : i32, i32
  }
  func.func @transform_2(%arg0: i32, %arg1: i32) -> (i32, i32) {
    %c0_i32 = arith.constant 0 : i32
    %c0_i32_0 = arith.constant 0 : i32
    return %c0_i32, %arg1 : i32, i32
  }
  func.func @transform_3(%arg0: i32, %arg1: i32) -> (i32, i32) {
    %c0_i32 = arith.constant 0 : i32
    %c0_i32_0 = arith.constant 0 : i32
    %c0_i32_1 = arith.constant 0 : i32
    return %c0_i32, %c0_i32_0 : i32, i32
  }
  func.func @transform_4(%arg0: i32, %arg1: i32) -> (i32, i32) {
    %c0_i32 = arith.constant 0 : i32
    %c0_i32_0 = arith.constant 0 : i32
    %c0_i32_1 = arith.constant 0 : i32
    return %c0_i32, %c0_i32_0 : i32, i32
  }
  func.func @transform_5(%arg0: i32, %arg1: i32) -> (i32, i32) {
    %c0_i32 = arith.constant 0 : i32
    return %arg0, %arg1 : i32, i32
  }
}

module attributes {stable_mosaic.version = 11 : i64} {
  func.func @kernel(%arg0: i32, %arg1: memref<1x5x96xf32, #tpu.memory_space<vmem>>, %arg2: memref<1x5x32xf32, #tpu.memory_space<vmem>>, %arg3: memref<1x5x5xf32, #tpu.memory_space<vmem>>) attributes {dimension_semantics = [#tpu.dimension_semantics<parallel>], iteration_bounds = array<i64: 2>, scalar_prefetch = 0 : i64, scratch_operands = 0 : i64, tpu.core_type = #tpu.core_type<tc>, window_params = [{transform_indices = @transform_0, window_bounds = array<i64: 1, 5, 96>}, {transform_indices = @transform_1, window_bounds = array<i64: 1, 5, 32>}, {transform_indices = @transform_2, window_bounds = array<i64: 1, 5, 5>}]} {
    %c0 = arith.constant 0 : index
    %c0_0 = arith.constant 0 : index
    %c0_1 = arith.constant 0 : index
    %0 = vector.load %arg1[%c0, %c0_0, %c0_1] : memref<1x5x96xf32, #tpu.memory_space<vmem>>, vector<1x5x96xf32>
    %1 = vector.shape_cast %0 : vector<1x5x96xf32> to vector<5x96xf32>
    %cst = arith.constant 0.000000e+00 : f32
    %2 = vector.broadcast %cst : f32 to vector<5x5xf32>
    %3 = vector.extract_strided_slice %1 {offsets = [0, 0], sizes = [5, 8], strides = [1, 1]} : vector<5x96xf32> to vector<5x8xf32>
    %cst_2 = arith.constant 0.353553385 : f32
    %4 = vector.broadcast %cst_2 : f32 to vector<5x8xf32>
    %5 = arith.mulf %3, %4 : vector<5x8xf32>
    %6 = arith.truncf %5 : vector<5x8xf32> to vector<5x8xbf16>
    %7 = vector.extract_strided_slice %1 {offsets = [0, 32], sizes = [5, 8], strides = [1, 1]} : vector<5x96xf32> to vector<5x8xf32>
    %8 = arith.truncf %7 : vector<5x8xf32> to vector<5x8xbf16>
    %9 = vector.extract_strided_slice %1 {offsets = [0, 64], sizes = [5, 8], strides = [1, 1]} : vector<5x96xf32> to vector<5x8xf32>
    %10 = arith.truncf %9 : vector<5x8xf32> to vector<5x8xbf16>
    %cst_3 = arith.constant dense<0.000000e+00> : vector<5x5xf32>
    %11 = tpu.matmul %6, %8, %cst_3 {dimension_numbers = #tpu.dot_dimension_numbers<[1], [1], [0], [0], [0, 0, 1, 0], [], []>} : vector<5x8xbf16>, vector<5x8xbf16>, vector<5x5xf32> -> vector<5x5xf32>
    %cst_4 = arith.constant dense<0xFF800000> : vector<5xf32>
    %12 = vector.multi_reduction <maximumf>, %11, %cst_4 [1] : vector<5x5xf32> to vector<5xf32>
    %13 = vector.shape_cast %12 : vector<5xf32> to vector<5x1xf32>
    %14 = vector.broadcast %13 : vector<5x1xf32> to vector<5x5xf32>
    %15 = arith.subf %11, %14 : vector<5x5xf32>
    %16 = math.exp %15 : vector<5x5xf32>
    %cst_5 = arith.constant dense<0.000000e+00> : vector<5xf32>
    %17 = vector.multi_reduction <add>, %16, %cst_5 [1] : vector<5x5xf32> to vector<5xf32>
    %18 = vector.shape_cast %17 : vector<5xf32> to vector<5x1xf32>
    %19 = vector.broadcast %18 : vector<5x1xf32> to vector<5x5xf32>
    %20 = arith.divf %16, %19 : vector<5x5xf32>
    %21 = arith.truncf %20 : vector<5x5xf32> to vector<5x5xbf16>
    %cst_6 = arith.constant dense<0.000000e+00> : vector<5x8xf32>
    %22 = tpu.matmul %21, %10, %cst_6 {dimension_numbers = #tpu.dot_dimension_numbers<[1], [0], [0], [1], [0, 0, 1, 1], [], []>} : vector<5x5xbf16>, vector<5x8xbf16>, vector<5x8xf32> -> vector<5x8xf32>
    %c0_7 = arith.constant 0 : index
    %c0_8 = arith.constant 0 : index
    %c0_9 = arith.constant 0 : index
    %23 = vector.load %arg2[%c0_7, %c0_8, %c0_9] : memref<1x5x32xf32, #tpu.memory_space<vmem>>, vector<1x5x8xf32>
    %24 = vector.shape_cast %23 : vector<1x5x8xf32> to vector<5x8xf32>
    %25 = vector.shape_cast %22 : vector<5x8xf32> to vector<1x5x8xf32>
    tpu.vector_store %arg2[%c0_7, %c0_8, %c0_9], %25 {strides = array<i32>} : memref<1x5x32xf32, #tpu.memory_space<vmem>>, vector<1x5x8xf32>,
    %26 = arith.addf %2, %20 : vector<5x5xf32>
    %27 = vector.extract_strided_slice %1 {offsets = [0, 8], sizes = [5, 8], strides = [1, 1]} : vector<5x96xf32> to vector<5x8xf32>
    %cst_10 = arith.constant 0.353553385 : f32
    %28 = vector.broadcast %cst_10 : f32 to vector<5x8xf32>
    %29 = arith.mulf %27, %28 : vector<5x8xf32>
    %30 = arith.truncf %29 : vector<5x8xf32> to vector<5x8xbf16>
    %31 = vector.extract_strided_slice %1 {offsets = [0, 40], sizes = [5, 8], strides = [1, 1]} : vector<5x96xf32> to vector<5x8xf32>
    %32 = arith.truncf %31 : vector<5x8xf32> to vector<5x8xbf16>
    %33 = vector.extract_strided_slice %1 {offsets = [0, 72], sizes = [5, 8], strides = [1, 1]} : vector<5x96xf32> to vector<5x8xf32>
    %34 = arith.truncf %33 : vector<5x8xf32> to vector<5x8xbf16>
    %cst_11 = arith.constant dense<0.000000e+00> : vector<5x5xf32>
    %35 = tpu.matmul %30, %32, %cst_11 {dimension_numbers = #tpu.dot_dimension_numbers<[1], [1], [0], [0], [0, 0, 1, 0], [], []>} : vector<5x8xbf16>, vector<5x8xbf16>, vector<5x5xf32> -> vector<5x5xf32>
    %cst_12 = arith.constant dense<0xFF800000> : vector<5xf32>
    %36 = vector.multi_reduction <maximumf>, %35, %cst_12 [1] : vector<5x5xf32> to vector<5xf32>
    %37 = vector.shape_cast %36 : vector<5xf32> to vector<5x1xf32>
    %38 = vector.broadcast %37 : vector<5x1xf32> to vector<5x5xf32>
    %39 = arith.subf %35, %38 : vector<5x5xf32>
    %40 = math.exp %39 : vector<5x5xf32>
    %cst_13 = arith.constant dense<0.000000e+00> : vector<5xf32>
    %41 = vector.multi_reduction <add>, %40, %cst_13 [1] : vector<5x5xf32> to vector<5xf32>
    %42 = vector.shape_cast %41 : vector<5xf32> to vector<5x1xf32>
    %43 = vector.broadcast %42 : vector<5x1xf32> to vector<5x5xf32>
    %44 = arith.divf %40, %43 : vector<5x5xf32>
    %45 = arith.truncf %44 : vector<5x5xf32> to vector<5x5xbf16>
    %cst_14 = arith.constant dense<0.000000e+00> : vector<5x8xf32>
    %46 = tpu.matmul %45, %34, %cst_14 {dimension_numbers = #tpu.dot_dimension_numbers<[1], [0], [0], [1], [0, 0, 1, 1], [], []>} : vector<5x5xbf16>, vector<5x8xbf16>, vector<5x8xf32> -> vector<5x8xf32>
    %c0_15 = arith.constant 0 : index
    %c0_16 = arith.constant 0 : index
    %c8 = arith.constant 8 : index
    %47 = vector.load %arg2[%c0_15, %c0_16, %c8] : memref<1x5x32xf32, #tpu.memory_space<vmem>>, vector<1x5x8xf32>
    %48 = vector.shape_cast %47 : vector<1x5x8xf32> to vector<5x8xf32>
    %49 = vector.shape_cast %46 : vector<5x8xf32> to vector<1x5x8xf32>
    tpu.vector_store %arg2[%c0_15, %c0_16, %c8], %49 {strides = array<i32>} : memref<1x5x32xf32, #tpu.memory_space<vmem>>, vector<1x5x8xf32>,
    %50 = arith.addf %26, %44 : vector<5x5xf32>
    %51 = vector.extract_strided_slice %1 {offsets = [0, 16], sizes = [5, 8], strides = [1, 1]} : vector<5x96xf32> to vector<5x8xf32>
    %cst_17 = arith.constant 0.353553385 : f32
    %52 = vector.broadcast %cst_17 : f32 to vector<5x8xf32>
    %53 = arith.mulf %51, %52 : vector<5x8xf32>
    %54 = arith.truncf %53 : vector<5x8xf32> to vector<5x8xbf16>
    %55 = vector.extract_strided_slice %1 {offsets = [0, 48], sizes = [5, 8], strides = [1, 1]} : vector<5x96xf32> to vector<5x8xf32>
    %56 = arith.truncf %55 : vector<5x8xf32> to vector<5x8xbf16>
    %57 = vector.extract_strided_slice %1 {offsets = [0, 80], sizes = [5, 8], strides = [1, 1]} : vector<5x96xf32> to vector<5x8xf32>
    %58 = arith.truncf %57 : vector<5x8xf32> to vector<5x8xbf16>
    %cst_18 = arith.constant dense<0.000000e+00> : vector<5x5xf32>
    %59 = tpu.matmul %54, %56, %cst_18 {dimension_numbers = #tpu.dot_dimension_numbers<[1], [1], [0], [0], [0, 0, 1, 0], [], []>} : vector<5x8xbf16>, vector<5x8xbf16>, vector<5x5xf32> -> vector<5x5xf32>
    %cst_19 = arith.constant dense<0xFF800000> : vector<5xf32>
    %60 = vector.multi_reduction <maximumf>, %59, %cst_19 [1] : vector<5x5xf32> to vector<5xf32>
    %61 = vector.shape_cast %60 : vector<5xf32> to vector<5x1xf32>
    %62 = vector.broadcast %61 : vector<5x1xf32> to vector<5x5xf32>
    %63 = arith.subf %59, %62 : vector<5x5xf32>
    %64 = math.exp %63 : vector<5x5xf32>
    %cst_20 = arith.constant dense<0.000000e+00> : vector<5xf32>
    %65 = vector.multi_reduction <add>, %64, %cst_20 [1] : vector<5x5xf32> to vector<5xf32>
    %66 = vector.shape_cast %65 : vector<5xf32> to vector<5x1xf32>
    %67 = vector.broadcast %66 : vector<5x1xf32> to vector<5x5xf32>
    %68 = arith.divf %64, %67 : vector<5x5xf32>
    %69 = arith.truncf %68 : vector<5x5xf32> to vector<5x5xbf16>
    %cst_21 = arith.constant dense<0.000000e+00> : vector<5x8xf32>
    %70 = tpu.matmul %69, %58, %cst_21 {dimension_numbers = #tpu.dot_dimension_numbers<[1], [0], [0], [1], [0, 0, 1, 1], [], []>} : vector<5x5xbf16>, vector<5x8xbf16>, vector<5x8xf32> -> vector<5x8xf32>
    %c0_22 = arith.constant 0 : index
    %c0_23 = arith.constant 0 : index
    %c16 = arith.constant 16 : index
    %71 = vector.load %arg2[%c0_22, %c0_23, %c16] : memref<1x5x32xf32, #tpu.memory_space<vmem>>, vector<1x5x8xf32>
    %72 = vector.shape_cast %71 : vector<1x5x8xf32> to vector<5x8xf32>
    %73 = vector.shape_cast %70 : vector<5x8xf32> to vector<1x5x8xf32>
    tpu.vector_store %arg2[%c0_22, %c0_23, %c16], %73 {strides = array<i32>} : memref<1x5x32xf32, #tpu.memory_space<vmem>>, vector<1x5x8xf32>,
    %74 = arith.addf %50, %68 : vector<5x5xf32>
    %75 = vector.extract_strided_slice %1 {offsets = [0, 24], sizes = [5, 8], strides = [1, 1]} : vector<5x96xf32> to vector<5x8xf32>
    %cst_24 = arith.constant 0.353553385 : f32
    %76 = vector.broadcast %cst_24 : f32 to vector<5x8xf32>
    %77 = arith.mulf %75, %76 : vector<5x8xf32>
    %78 = arith.truncf %77 : vector<5x8xf32> to vector<5x8xbf16>
    %79 = vector.extract_strided_slice %1 {offsets = [0, 56], sizes = [5, 8], strides = [1, 1]} : vector<5x96xf32> to vector<5x8xf32>
    %80 = arith.truncf %79 : vector<5x8xf32> to vector<5x8xbf16>
    %81 = vector.extract_strided_slice %1 {offsets = [0, 88], sizes = [5, 8], strides = [1, 1]} : vector<5x96xf32> to vector<5x8xf32>
    %82 = arith.truncf %81 : vector<5x8xf32> to vector<5x8xbf16>
    %cst_25 = arith.constant dense<0.000000e+00> : vector<5x5xf32>
    %83 = tpu.matmul %78, %80, %cst_25 {dimension_numbers = #tpu.dot_dimension_numbers<[1], [1], [0], [0], [0, 0, 1, 0], [], []>} : vector<5x8xbf16>, vector<5x8xbf16>, vector<5x5xf32> -> vector<5x5xf32>
    %cst_26 = arith.constant dense<0xFF800000> : vector<5xf32>
    %84 = vector.multi_reduction <maximumf>, %83, %cst_26 [1] : vector<5x5xf32> to vector<5xf32>
    %85 = vector.shape_cast %84 : vector<5xf32> to vector<5x1xf32>
    %86 = vector.broadcast %85 : vector<5x1xf32> to vector<5x5xf32>
    %87 = arith.subf %83, %86 : vector<5x5xf32>
    %88 = math.exp %87 : vector<5x5xf32>
    %cst_27 = arith.constant dense<0.000000e+00> : vector<5xf32>
    %89 = vector.multi_reduction <add>, %88, %cst_27 [1] : vector<5x5xf32> to vector<5xf32>
    %90 = vector.shape_cast %89 : vector<5xf32> to vector<5x1xf32>
    %91 = vector.broadcast %90 : vector<5x1xf32> to vector<5x5xf32>
    %92 = arith.divf %88, %91 : vector<5x5xf32>
    %93 = arith.truncf %92 : vector<5x5xf32> to vector<5x5xbf16>
    %cst_28 = arith.constant dense<0.000000e+00> : vector<5x8xf32>
    %94 = tpu.matmul %93, %82, %cst_28 {dimension_numbers = #tpu.dot_dimension_numbers<[1], [0], [0], [1], [0, 0, 1, 1], [], []>} : vector<5x5xbf16>, vector<5x8xbf16>, vector<5x8xf32> -> vector<5x8xf32>
    %c0_29 = arith.constant 0 : index
    %c0_30 = arith.constant 0 : index
    %c24 = arith.constant 24 : index
    %95 = vector.load %arg2[%c0_29, %c0_30, %c24] : memref<1x5x32xf32, #tpu.memory_space<vmem>>, vector<1x5x8xf32>
    %96 = vector.shape_cast %95 : vector<1x5x8xf32> to vector<5x8xf32>
    %97 = vector.shape_cast %94 : vector<5x8xf32> to vector<1x5x8xf32>
    tpu.vector_store %arg2[%c0_29, %c0_30, %c24], %97 {strides = array<i32>} : memref<1x5x32xf32, #tpu.memory_space<vmem>>, vector<1x5x8xf32>,
    %98 = arith.addf %74, %92 : vector<5x5xf32>
    %cst_31 = arith.constant 2.500000e-01 : f32
    %99 = vector.broadcast %cst_31 : f32 to vector<5x5xf32>
    %100 = arith.mulf %98, %99 : vector<5x5xf32>
    %c0_32 = arith.constant 0 : index
    %c0_33 = arith.constant 0 : index
    %c0_34 = arith.constant 0 : index
    %101 = vector.load %arg3[%c0_32, %c0_33, %c0_34] : memref<1x5x5xf32, #tpu.memory_space<vmem>>, vector<1x5x5xf32>
    %102 = vector.shape_cast %101 : vector<1x5x5xf32> to vector<5x5xf32>
    %103 = vector.shape_cast %100 : vector<5x5xf32> to vector<1x5x5xf32>
    tpu.vector_store %arg3[%c0_32, %c0_33, %c0_34], %103 {strides = array<i32>} : memref<1x5x5xf32, #tpu.memory_space<vmem>>, vector<1x5x5xf32>,
    return
  }
  func.func @transform_0(%arg0: i32) -> (i32, i32, i32) {
    %c0_i32 = arith.constant 0 : i32
    %c0_i32_0 = arith.constant 0 : i32
    %c0_i32_1 = arith.constant 0 : i32
    return %arg0, %c0_i32, %c0_i32_0 : i32, i32, i32
  }
  func.func @transform_1(%arg0: i32) -> (i32, i32, i32) {
    %c0_i32 = arith.constant 0 : i32
    %c0_i32_0 = arith.constant 0 : i32
    %c0_i32_1 = arith.constant 0 : i32
    return %arg0, %c0_i32, %c0_i32_0 : i32, i32, i32
  }
  func.func @transform_2(%arg0: i32) -> (i32, i32, i32) {
    %c0_i32 = arith.constant 0 : i32
    %c0_i32_0 = arith.constant 0 : i32
    %c0_i32_1 = arith.constant 0 : i32
    return %arg0, %c0_i32, %c0_i32_0 : i32, i32, i32
  }
}

module attributes {stable_mosaic.version = 11 : i64} {
  func.func @kernel(%arg0: i32, %arg1: i32, %arg2: memref<10x32xf32, #tpu.memory_space<vmem>>, %arg3: memref<32x32xbf16, #tpu.memory_space<vmem>>, %arg4: memref<1x32xf32, #tpu.memory_space<vmem>>, %arg5: memref<10x32xf32, #tpu.memory_space<vmem>>, %arg6: memref<10x32xf32, #tpu.memory_space<vmem>>) attributes {dimension_semantics = [#tpu.dimension_semantics<parallel>, #tpu.dimension_semantics<parallel>], iteration_bounds = array<i64: 1, 1>, scalar_prefetch = 0 : i64, scratch_operands = 0 : i64, tpu.core_type = #tpu.core_type<tc>, window_params = [{transform_indices = @transform_0, window_bounds = array<i64: 10, 32>}, {transform_indices = @transform_1, window_bounds = array<i64: 32, 32>}, {transform_indices = @transform_2, window_bounds = array<i64: 1, 32>}, {transform_indices = @transform_3, window_bounds = array<i64: 10, 32>}, {transform_indices = @transform_4, window_bounds = array<i64: 10, 32>}]} {
    %c0 = arith.constant 0 : index
    %c0_0 = arith.constant 0 : index
    %0 = vector.load %arg2[%c0, %c0_0] : memref<10x32xf32, #tpu.memory_space<vmem>>, vector<10x32xf32>
    %1 = arith.truncf %0 : vector<10x32xf32> to vector<10x32xbf16>
    %c0_1 = arith.constant 0 : index
    %c0_2 = arith.constant 0 : index
    %2 = vector.load %arg3[%c0_1, %c0_2] : memref<32x32xbf16, #tpu.memory_space<vmem>>, vector<32x32xbf16>
    %cst = arith.constant dense<0.000000e+00> : vector<10x32xf32>
    %3 = tpu.matmul %1, %2, %cst {dimension_numbers = #tpu.dot_dimension_numbers<[1], [0], [0], [1], [0, 0, 1, 1], [], []>} : vector<10x32xbf16>, vector<32x32xbf16>, vector<10x32xf32> -> vector<10x32xf32>
    %c0_3 = arith.constant 0 : index
    %c0_4 = arith.constant 0 : index
    %4 = vector.load %arg4[%c0_3, %c0_4] : memref<1x32xf32, #tpu.memory_space<vmem>>, vector<1x32xf32>
    %5 = vector.broadcast %4 : vector<1x32xf32> to vector<10x32xf32>
    %6 = arith.addf %3, %5 : vector<10x32xf32>
    %c0_5 = arith.constant 0 : index
    %c0_6 = arith.constant 0 : index
    %7 = vector.load %arg5[%c0_5, %c0_6] : memref<10x32xf32, #tpu.memory_space<vmem>>, vector<10x32xf32>
    %8 = arith.addf %6, %7 : vector<10x32xf32>
    %c0_7 = arith.constant 0 : index
    %c0_8 = arith.constant 0 : index
    %9 = vector.load %arg6[%c0_7, %c0_8] : memref<10x32xf32, #tpu.memory_space<vmem>>, vector<10x32xf32>
    tpu.vector_store %arg6[%c0_7, %c0_8], %8 {strides = array<i32>} : memref<10x32xf32, #tpu.memory_space<vmem>>, vector<10x32xf32>,
    return
  }
  func.func @transform_0(%arg0: i32, %arg1: i32) -> (i32, i32) {
    %c0_i32 = arith.constant 0 : i32
    %c0_i32_0 = arith.constant 0 : i32
    return %arg0, %c0_i32 : i32, i32
  }
  func.func @transform_1(%arg0: i32, %arg1: i32) -> (i32, i32) {
    %c0_i32 = arith.constant 0 : i32
    %c0_i32_0 = arith.constant 0 : i32
    return %c0_i32, %arg1 : i32, i32
  }
  func.func @transform_2(%arg0: i32, %arg1: i32) -> (i32, i32) {
    %c0_i32 = arith.constant 0 : i32
    %c0_i32_0 = arith.constant 0 : i32
    return %c0_i32, %arg1 : i32, i32
  }
  func.func @transform_3(%arg0: i32, %arg1: i32) -> (i32, i32) {
    %c0_i32 = arith.constant 0 : i32
    return %arg0, %arg1 : i32, i32
  }
  func.func @transform_4(%arg0: i32, %arg1: i32) -> (i32, i32) {
    %c0_i32 = arith.constant 0 : i32
    return %arg0, %arg1 : i32, i32
  }
}

module attributes {stable_mosaic.version = 11 : i64} {
  func.func @kernel(%arg0: i32, %arg1: i32, %arg2: memref<10x32xf32, #tpu.memory_space<vmem>>, %arg3: memref<32x128xbf16, #tpu.memory_space<vmem>>, %arg4: memref<1x128xf32, #tpu.memory_space<vmem>>, %arg5: memref<1x32xf32, #tpu.memory_space<vmem>>, %arg6: memref<1x32xf32, #tpu.memory_space<vmem>>, %arg7: memref<10x128xf32, #tpu.memory_space<vmem>>) attributes {dimension_semantics = [#tpu.dimension_semantics<parallel>, #tpu.dimension_semantics<arbitrary>], iteration_bounds = array<i64: 1, 1>, scalar_prefetch = 0 : i64, scratch_operands = 0 : i64, tpu.core_type = #tpu.core_type<tc>, window_params = [{transform_indices = @transform_0, window_bounds = array<i64: 10, 32>}, {transform_indices = @transform_1, window_bounds = array<i64: 32, 128>}, {transform_indices = @transform_2, window_bounds = array<i64: 1, 128>}, {pipeline_mode = #tpu.pipeline_mode<synchronous>, transform_indices = @transform_3, window_bounds = array<i64: 1, 32>}, {pipeline_mode = #tpu.pipeline_mode<synchronous>, transform_indices = @transform_4, window_bounds = array<i64: 1, 32>}, {transform_indices = @transform_5, window_bounds = array<i64: 10, 128>}]} {
    %c0 = arith.constant 0 : index
    %c0_0 = arith.constant 0 : index
    %0 = vector.load %arg2[%c0, %c0_0] : memref<10x32xf32, #tpu.memory_space<vmem>>, vector<10x32xf32>
    %cst = arith.constant dense<0.000000e+00> : vector<10xf32>
    %1 = vector.multi_reduction <add>, %0, %cst [1] : vector<10x32xf32> to vector<10xf32>
    %2 = vector.shape_cast %1 : vector<10xf32> to vector<10x1xf32>
    %cst_1 = arith.constant 3.200000e+01 : f32
    %3 = vector.broadcast %cst_1 : f32 to vector<10x1xf32>
    %4 = arith.divf %2, %3 : vector<10x1xf32>
    %5 = vector.broadcast %4 : vector<10x1xf32> to vector<10x32xf32>
    %6 = arith.subf %0, %5 : vector<10x32xf32>
    %7 = arith.mulf %6, %6 : vector<10x32xf32>
    %cst_2 = arith.constant dense<0.000000e+00> : vector<10xf32>
    %8 = vector.multi_reduction <add>, %7, %cst_2 [1] : vector<10x32xf32> to vector<10xf32>
    %9 = vector.shape_cast %8 : vector<10xf32> to vector<10x1xf32>
    %cst_3 = arith.constant 3.200000e+01 : f32
    %10 = vector.broadcast %cst_3 : f32 to vector<10x1xf32>
    %11 = arith.divf %9, %10 : vector<10x1xf32>
    %12 = vector.broadcast %4 : vector<10x1xf32> to vector<10x32xf32>
    %13 = arith.subf %0, %12 : vector<10x32xf32>
    %cst_4 = arith.constant 9.99999974E-6 : f32
    %14 = vector.broadcast %cst_4 : f32 to vector<10x1xf32>
    %15 = arith.addf %11, %14 : vector<10x1xf32>
    %16 = math.rsqrt %15 : vector<10x1xf32>
    %17 = vector.broadcast %16 : vector<10x1xf32> to vector<10x32xf32>
    %18 = arith.mulf %13, %17 : vector<10x32xf32>
    %c0_5 = arith.constant 0 : index
    %c0_6 = arith.constant 0 : index
    %19 = vector.load %arg5[%c0_5, %c0_6] : memref<1x32xf32, #tpu.memory_space<vmem>>, vector<1x32xf32>
    %20 = vector.broadcast %19 : vector<1x32xf32> to vector<10x32xf32>
    %21 = arith.mulf %18, %20 : vector<10x32xf32>
    %c0_7 = arith.constant 0 : index
    %c0_8 = arith.constant 0 : index
    %22 = vector.load %arg6[%c0_7, %c0_8] : memref<1x32xf32, #tpu.memory_space<vmem>>, vector<1x32xf32>
    %23 = vector.broadcast %22 : vector<1x32xf32> to vector<10x32xf32>
    %24 = arith.addf %21, %23 : vector<10x32xf32>
    %25 = arith.truncf %24 : vector<10x32xf32> to vector<10x32xbf16>
    %c0_9 = arith.constant 0 : index
    %c0_10 = arith.constant 0 : index
    %26 = vector.load %arg3[%c0_9, %c0_10] : memref<32x128xbf16, #tpu.memory_space<vmem>>, vector<32x128xbf16>
    %cst_11 = arith.constant dense<0.000000e+00> : vector<10x128xf32>
    %27 = tpu.matmul %25, %26, %cst_11 {dimension_numbers = #tpu.dot_dimension_numbers<[1], [0], [0], [1], [0, 0, 1, 1], [], []>} : vector<10x32xbf16>, vector<32x128xbf16>, vector<10x128xf32> -> vector<10x128xf32>
    %c0_12 = arith.constant 0 : index
    %c0_13 = arith.constant 0 : index
    %28 = vector.load %arg4[%c0_12, %c0_13] : memref<1x128xf32, #tpu.memory_space<vmem>>, vector<1x128xf32>
    %29 = vector.broadcast %28 : vector<1x128xf32> to vector<10x128xf32>
    %30 = arith.addf %27, %29 : vector<10x128xf32>
    %cst_14 = arith.constant 1.702000e+00 : f32
    %31 = vector.broadcast %cst_14 : f32 to vector<10x128xf32>
    %32 = arith.mulf %31, %30 : vector<10x128xf32>
    %33 = arith.negf %32 : vector<10x128xf32>
    %34 = math.exp %33 : vector<10x128xf32>
    %cst_15 = arith.constant 1.000000e+00 : f32
    %35 = vector.broadcast %cst_15 : f32 to vector<10x128xf32>
    %36 = arith.addf %35, %34 : vector<10x128xf32>
    %37 = arith.divf %35, %36 : vector<10x128xf32>
    %38 = arith.mulf %30, %37 : vector<10x128xf32>
    %c0_16 = arith.constant 0 : index
    %c0_17 = arith.constant 0 : index
    %39 = vector.load %arg7[%c0_16, %c0_17] : memref<10x128xf32, #tpu.memory_space<vmem>>, vector<10x128xf32>
    tpu.vector_store %arg7[%c0_16, %c0_17], %38 {strides = array<i32>} : memref<10x128xf32, #tpu.memory_space<vmem>>, vector<10x128xf32>,
    return
  }
  func.func @transform_0(%arg0: i32, %arg1: i32) -> (i32, i32) {
    %c0_i32 = arith.constant 0 : i32
    %c0_i32_0 = arith.constant 0 : i32
    return %arg0, %c0_i32 : i32, i32
  }
  func.func @transform_1(%arg0: i32, %arg1: i32) -> (i32, i32) {
    %c0_i32 = arith.constant 0 : i32
    %c0_i32_0 = arith.constant 0 : i32
    return %c0_i32, %arg1 : i32, i32
  }
  func.func @transform_2(%arg0: i32, %arg1: i32) -> (i32, i32) {
    %c0_i32 = arith.constant 0 : i32
    %c0_i32_0 = arith.constant 0 : i32
    return %c0_i32, %arg1 : i32, i32
  }
  func.func @transform_3(%arg0: i32, %arg1: i32) -> (i32, i32) {
    %c0_i32 = arith.constant 0 : i32
    %c0_i32_0 = arith.constant 0 : i32
    %c0_i32_1 = arith.constant 0 : i32
    return %c0_i32, %c0_i32_0 : i32, i32
  }
  func.func @transform_4(%arg0: i32, %arg1: i32) -> (i32, i32) {
    %c0_i32 = arith.constant 0 : i32
    %c0_i32_0 = arith.constant 0 : i32
    %c0_i32_1 = arith.constant 0 : i32
    return %c0_i32, %c0_i32_0 : i32, i32
  }
  func.func @transform_5(%arg0: i32, %arg1: i32) -> (i32, i32) {
    %c0_i32 = arith.constant 0 : i32
    return %arg0, %arg1 : i32, i32
  }
}

module attributes {stable_mosaic.version = 11 : i64} {
  func.func @kernel(%arg0: i32, %arg1: i32, %arg2: memref<10x128xf32, #tpu.memory_space<vmem>>, %arg3: memref<128x32xbf16, #tpu.memory_space<vmem>>, %arg4: memref<1x32xf32, #tpu.memory_space<vmem>>, %arg5: memref<10x32xf32, #tpu.memory_space<vmem>>, %arg6: memref<10x32xf32, #tpu.memory_space<vmem>>) attributes {dimension_semantics = [#tpu.dimension_semantics<parallel>, #tpu.dimension_semantics<parallel>], iteration_bounds = array<i64: 1, 1>, scalar_prefetch = 0 : i64, scratch_operands = 0 : i64, tpu.core_type = #tpu.core_type<tc>, window_params = [{transform_indices = @transform_0, window_bounds = array<i64: 10, 128>}, {transform_indices = @transform_1, window_bounds = array<i64: 128, 32>}, {transform_indices = @transform_2, window_bounds = array<i64: 1, 32>}, {transform_indices = @transform_3, window_bounds = array<i64: 10, 32>}, {transform_indices = @transform_4, window_bounds = array<i64: 10, 32>}]} {
    %c0 = arith.constant 0 : index
    %c0_0 = arith.constant 0 : index
    %0 = vector.load %arg2[%c0, %c0_0] : memref<10x128xf32, #tpu.memory_space<vmem>>, vector<10x128xf32>
    %1 = arith.truncf %0 : vector<10x128xf32> to vector<10x128xbf16>
    %c0_1 = arith.constant 0 : index
    %c0_2 = arith.constant 0 : index
    %2 = vector.load %arg3[%c0_1, %c0_2] : memref<128x32xbf16, #tpu.memory_space<vmem>>, vector<128x32xbf16>
    %cst = arith.constant dense<0.000000e+00> : vector<10x32xf32>
    %3 = tpu.matmul %1, %2, %cst {dimension_numbers = #tpu.dot_dimension_numbers<[1], [0], [0], [1], [0, 0, 1, 1], [], []>} : vector<10x128xbf16>, vector<128x32xbf16>, vector<10x32xf32> -> vector<10x32xf32>
    %c0_3 = arith.constant 0 : index
    %c0_4 = arith.constant 0 : index
    %4 = vector.load %arg4[%c0_3, %c0_4] : memref<1x32xf32, #tpu.memory_space<vmem>>, vector<1x32xf32>
    %5 = vector.broadcast %4 : vector<1x32xf32> to vector<10x32xf32>
    %6 = arith.addf %3, %5 : vector<10x32xf32>
    %c0_5 = arith.constant 0 : index
    %c0_6 = arith.constant 0 : index
    %7 = vector.load %arg5[%c0_5, %c0_6] : memref<10x32xf32, #tpu.memory_space<vmem>>, vector<10x32xf32>
    %8 = arith.addf %6, %7 : vector<10x32xf32>
    %c0_7 = arith.constant 0 : index
    %c0_8 = arith.constant 0 : index
    %9 = vector.load %arg6[%c0_7, %c0_8] : memref<10x32xf32, #tpu.memory_space<vmem>>, vector<10x32xf32>
    tpu.vector_store %arg6[%c0_7, %c0_8], %8 {strides = array<i32>} : memref<10x32xf32, #tpu.memory_space<vmem>>, vector<10x32xf32>,
    return
  }
  func.func @transform_0(%arg0: i32, %arg1: i32) -> (i32, i32) {
    %c0_i32 = arith.constant 0 : i32
    %c0_i32_0 = arith.constant 0 : i32
    return %arg0, %c0_i32 : i32, i32
  }
  func.func @transform_1(%arg0: i32, %arg1: i32) -> (i32, i32) {
    %c0_i32 = arith.constant 0 : i32
    %c0_i32_0 = arith.constant 0 : i32
    return %c0_i32, %arg1 : i32, i32
  }
  func.func @transform_2(%arg0: i32, %arg1: i32) -> (i32, i32) {
    %c0_i32 = arith.constant 0 : i32
    %c0_i32_0 = arith.constant 0 : i32
    return %c0_i32, %arg1 : i32, i32
  }
  func.func @transform_3(%arg0: i32, %arg1: i32) -> (i32, i32) {
    %c0_i32 = arith.constant 0 : i32
    return %arg0, %arg1 : i32, i32
  }
  func.func @transform_4(%arg0: i32, %arg1: i32) -> (i32, i32) {
    %c0_i32 = arith.constant 0 : i32
    return %arg0, %arg1 : i32, i32
  }
}

module attributes {stable_mosaic.version = 11 : i64} {
  func.func @kernel(%arg0: i32, %arg1: i32, %arg2: memref<10x32xf32, #tpu.memory_space<vmem>>, %arg3: memref<32x96xbf16, #tpu.memory_space<vmem>>, %arg4: memref<1x96xf32, #tpu.memory_space<vmem>>, %arg5: memref<1x32xf32, #tpu.memory_space<vmem>>, %arg6: memref<1x32xf32, #tpu.memory_space<vmem>>, %arg7: memref<10x96xf32, #tpu.memory_space<vmem>>, %arg8: memref<10x32xf32, #tpu.memory_space<vmem>>) attributes {dimension_semantics = [#tpu.dimension_semantics<parallel>, #tpu.dimension_semantics<arbitrary>], iteration_bounds = array<i64: 1, 1>, scalar_prefetch = 0 : i64, scratch_operands = 0 : i64, tpu.core_type = #tpu.core_type<tc>, window_params = [{transform_indices = @transform_0, window_bounds = array<i64: 10, 32>}, {transform_indices = @transform_1, window_bounds = array<i64: 32, 96>}, {transform_indices = @transform_2, window_bounds = array<i64: 1, 96>}, {pipeline_mode = #tpu.pipeline_mode<synchronous>, transform_indices = @transform_3, window_bounds = array<i64: 1, 32>}, {pipeline_mode = #tpu.pipeline_mode<synchronous>, transform_indices = @transform_4, window_bounds = array<i64: 1, 32>}, {transform_indices = @transform_5, window_bounds = array<i64: 10, 96>}, {transform_indices = @transform_6, window_bounds = array<i64: 10, 32>}]} {
    %c0 = arith.constant 0 : index
    %c0_0 = arith.constant 0 : index
    %0 = vector.load %arg2[%c0, %c0_0] : memref<10x32xf32, #tpu.memory_space<vmem>>, vector<10x32xf32>
    %cst = arith.constant dense<0.000000e+00> : vector<10xf32>
    %1 = vector.multi_reduction <add>, %0, %cst [1] : vector<10x32xf32> to vector<10xf32>
    %2 = vector.shape_cast %1 : vector<10xf32> to vector<10x1xf32>
    %cst_1 = arith.constant 3.200000e+01 : f32
    %3 = vector.broadcast %cst_1 : f32 to vector<10x1xf32>
    %4 = arith.divf %2, %3 : vector<10x1xf32>
    %5 = vector.broadcast %4 : vector<10x1xf32> to vector<10x32xf32>
    %6 = arith.subf %0, %5 : vector<10x32xf32>
    %7 = arith.mulf %6, %6 : vector<10x32xf32>
    %cst_2 = arith.constant dense<0.000000e+00> : vector<10xf32>
    %8 = vector.multi_reduction <add>, %7, %cst_2 [1] : vector<10x32xf32> to vector<10xf32>
    %9 = vector.shape_cast %8 : vector<10xf32> to vector<10x1xf32>
    %cst_3 = arith.constant 3.200000e+01 : f32
    %10 = vector.broadcast %cst_3 : f32 to vector<10x1xf32>
    %11 = arith.divf %9, %10 : vector<10x1xf32>
    %12 = vector.broadcast %4 : vector<10x1xf32> to vector<10x32xf32>
    %13 = arith.subf %0, %12 : vector<10x32xf32>
    %cst_4 = arith.constant 9.99999974E-6 : f32
    %14 = vector.broadcast %cst_4 : f32 to vector<10x1xf32>
    %15 = arith.addf %11, %14 : vector<10x1xf32>
    %16 = math.rsqrt %15 : vector<10x1xf32>
    %17 = vector.broadcast %16 : vector<10x1xf32> to vector<10x32xf32>
    %18 = arith.mulf %13, %17 : vector<10x32xf32>
    %c0_5 = arith.constant 0 : index
    %c0_6 = arith.constant 0 : index
    %19 = vector.load %arg5[%c0_5, %c0_6] : memref<1x32xf32, #tpu.memory_space<vmem>>, vector<1x32xf32>
    %20 = vector.broadcast %19 : vector<1x32xf32> to vector<10x32xf32>
    %21 = arith.mulf %18, %20 : vector<10x32xf32>
    %c0_7 = arith.constant 0 : index
    %c0_8 = arith.constant 0 : index
    %22 = vector.load %arg6[%c0_7, %c0_8] : memref<1x32xf32, #tpu.memory_space<vmem>>, vector<1x32xf32>
    %23 = vector.broadcast %22 : vector<1x32xf32> to vector<10x32xf32>
    %24 = arith.addf %21, %23 : vector<10x32xf32>
    %c0_9 = arith.constant 0 : index
    %c0_10 = arith.constant 0 : index
    %25 = vector.load %arg8[%c0_9, %c0_10] : memref<10x32xf32, #tpu.memory_space<vmem>>, vector<10x32xf32>
    tpu.vector_store %arg8[%c0_9, %c0_10], %24 {strides = array<i32>} : memref<10x32xf32, #tpu.memory_space<vmem>>, vector<10x32xf32>,
    %26 = arith.truncf %24 : vector<10x32xf32> to vector<10x32xbf16>
    %c0_11 = arith.constant 0 : index
    %c0_12 = arith.constant 0 : index
    %27 = vector.load %arg3[%c0_11, %c0_12] : memref<32x96xbf16, #tpu.memory_space<vmem>>, vector<32x96xbf16>
    %cst_13 = arith.constant dense<0.000000e+00> : vector<10x96xf32>
    %28 = tpu.matmul %26, %27, %cst_13 {dimension_numbers = #tpu.dot_dimension_numbers<[1], [0], [0], [1], [0, 0, 1, 1], [], []>} : vector<10x32xbf16>, vector<32x96xbf16>, vector<10x96xf32> -> vector<10x96xf32>
    %c0_14 = arith.constant 0 : index
    %c0_15 = arith.constant 0 : index
    %29 = vector.load %arg4[%c0_14, %c0_15] : memref<1x96xf32, #tpu.memory_space<vmem>>, vector<1x96xf32>
    %30 = vector.broadcast %29 : vector<1x96xf32> to vector<10x96xf32>
    %31 = arith.addf %28, %30 : vector<10x96xf32>
    %c0_16 = arith.constant 0 : index
    %c0_17 = arith.constant 0 : index
    %32 = vector.load %arg7[%c0_16, %c0_17] : memref<10x96xf32, #tpu.memory_space<vmem>>, vector<10x96xf32>
    tpu.vector_store %arg7[%c0_16, %c0_17], %31 {strides = array<i32>} : memref<10x96xf32, #tpu.memory_space<vmem>>, vector<10x96xf32>,
    return
  }
  func.func @transform_0(%arg0: i32, %arg1: i32) -> (i32, i32) {
    %c0_i32 = arith.constant 0 : i32
    %c0_i32_0 = arith.constant 0 : i32
    return %arg0, %c0_i32 : i32, i32
  }
  func.func @transform_1(%arg0: i32, %arg1: i32) -> (i32, i32) {
    %c0_i32 = arith.constant 0 : i32
    %c0_i32_0 = arith.constant 0 : i32
    return %c0_i32, %arg1 : i32, i32
  }
  func.func @transform_2(%arg0: i32, %arg1: i32) -> (i32, i32) {
    %c0_i32 = arith.constant 0 : i32
    %c0_i32_0 = arith.constant 0 : i32
    return %c0_i32, %arg1 : i32, i32
  }
  func.func @transform_3(%arg0: i32, %arg1: i32) -> (i32, i32) {
    %c0_i32 = arith.constant 0 : i32
    %c0_i32_0 = arith.constant 0 : i32
    %c0_i32_1 = arith.constant 0 : i32
    return %c0_i32, %c0_i32_0 : i32, i32
  }
  func.func @transform_4(%arg0: i32, %arg1: i32) -> (i32, i32) {
    %c0_i32 = arith.constant 0 : i32
    %c0_i32_0 = arith.constant 0 : i32
    %c0_i32_1 = arith.constant 0 : i32
    return %c0_i32, %c0_i32_0 : i32, i32
  }
  func.func @transform_5(%arg0: i32, %arg1: i32) -> (i32, i32) {
    %c0_i32 = arith.constant 0 : i32
    return %arg0, %arg1 : i32, i32
  }
  func.func @transform_6(%arg0: i32, %arg1: i32) -> (i32, i32) {
    %c0_i32 = arith.constant 0 : i32
    %c0_i32_0 = arith.constant 0 : i32
    return %arg0, %c0_i32 : i32, i32
  }
}

module attributes {stable_mosaic.version = 11 : i64} {
  func.func @kernel(%arg0: i32, %arg1: i32, %arg2: memref<10x32xf32, #tpu.memory_space<vmem>>, %arg3: memref<32x16xbf16, #tpu.memory_space<vmem>>, %arg4: memref<1x32xf32, #tpu.memory_space<vmem>>, %arg5: memref<1x32xf32, #tpu.memory_space<vmem>>, %arg6: memref<10x16xf32, #tpu.memory_space<vmem>>) attributes {dimension_semantics = [#tpu.dimension_semantics<parallel>, #tpu.dimension_semantics<arbitrary>], iteration_bounds = array<i64: 1, 1>, scalar_prefetch = 0 : i64, scratch_operands = 0 : i64, tpu.core_type = #tpu.core_type<tc>, window_params = [{transform_indices = @transform_0, window_bounds = array<i64: 10, 32>}, {transform_indices = @transform_1, window_bounds = array<i64: 32, 16>}, {pipeline_mode = #tpu.pipeline_mode<synchronous>, transform_indices = @transform_2, window_bounds = array<i64: 1, 32>}, {pipeline_mode = #tpu.pipeline_mode<synchronous>, transform_indices = @transform_3, window_bounds = array<i64: 1, 32>}, {transform_indices = @transform_4, window_bounds = array<i64: 10, 16>}]} {
    %c0 = arith.constant 0 : index
    %c0_0 = arith.constant 0 : index
    %0 = vector.load %arg2[%c0, %c0_0] : memref<10x32xf32, #tpu.memory_space<vmem>>, vector<10x32xf32>
    %cst = arith.constant dense<0.000000e+00> : vector<10xf32>
    %1 = vector.multi_reduction <add>, %0, %cst [1] : vector<10x32xf32> to vector<10xf32>
    %2 = vector.shape_cast %1 : vector<10xf32> to vector<10x1xf32>
    %cst_1 = arith.constant 3.200000e+01 : f32
    %3 = vector.broadcast %cst_1 : f32 to vector<10x1xf32>
    %4 = arith.divf %2, %3 : vector<10x1xf32>
    %5 = vector.broadcast %4 : vector<10x1xf32> to vector<10x32xf32>
    %6 = arith.subf %0, %5 : vector<10x32xf32>
    %7 = arith.mulf %6, %6 : vector<10x32xf32>
    %cst_2 = arith.constant dense<0.000000e+00> : vector<10xf32>
    %8 = vector.multi_reduction <add>, %7, %cst_2 [1] : vector<10x32xf32> to vector<10xf32>
    %9 = vector.shape_cast %8 : vector<10xf32> to vector<10x1xf32>
    %cst_3 = arith.constant 3.200000e+01 : f32
    %10 = vector.broadcast %cst_3 : f32 to vector<10x1xf32>
    %11 = arith.divf %9, %10 : vector<10x1xf32>
    %12 = vector.broadcast %4 : vector<10x1xf32> to vector<10x32xf32>
    %13 = arith.subf %0, %12 : vector<10x32xf32>
    %cst_4 = arith.constant 9.99999974E-6 : f32
    %14 = vector.broadcast %cst_4 : f32 to vector<10x1xf32>
    %15 = arith.addf %11, %14 : vector<10x1xf32>
    %16 = math.rsqrt %15 : vector<10x1xf32>
    %17 = vector.broadcast %16 : vector<10x1xf32> to vector<10x32xf32>
    %18 = arith.mulf %13, %17 : vector<10x32xf32>
    %c0_5 = arith.constant 0 : index
    %c0_6 = arith.constant 0 : index
    %19 = vector.load %arg4[%c0_5, %c0_6] : memref<1x32xf32, #tpu.memory_space<vmem>>, vector<1x32xf32>
    %20 = vector.broadcast %19 : vector<1x32xf32> to vector<10x32xf32>
    %21 = arith.mulf %18, %20 : vector<10x32xf32>
    %c0_7 = arith.constant 0 : index
    %c0_8 = arith.constant 0 : index
    %22 = vector.load %arg5[%c0_7, %c0_8] : memref<1x32xf32, #tpu.memory_space<vmem>>, vector<1x32xf32>
    %23 = vector.broadcast %22 : vector<1x32xf32> to vector<10x32xf32>
    %24 = arith.addf %21, %23 : vector<10x32xf32>
    %25 = arith.truncf %24 : vector<10x32xf32> to vector<10x32xbf16>
    %c0_9 = arith.constant 0 : index
    %c0_10 = arith.constant 0 : index
    %26 = vector.load %arg3[%c0_9, %c0_10] : memref<32x16xbf16, #tpu.memory_space<vmem>>, vector<32x16xbf16>
    %cst_11 = arith.constant dense<0.000000e+00> : vector<10x16xf32>
    %27 = tpu.matmul %25, %26, %cst_11 {dimension_numbers = #tpu.dot_dimension_numbers<[1], [0], [0], [1], [0, 0, 1, 1], [], []>} : vector<10x32xbf16>, vector<32x16xbf16>, vector<10x16xf32> -> vector<10x16xf32>
    %c0_12 = arith.constant 0 : index
    %c0_13 = arith.constant 0 : index
    %28 = vector.load %arg6[%c0_12, %c0_13] : memref<10x16xf32, #tpu.memory_space<vmem>>, vector<10x16xf32>
    tpu.vector_store %arg6[%c0_12, %c0_13], %27 {strides = array<i32>} : memref<10x16xf32, #tpu.memory_space<vmem>>, vector<10x16xf32>,
    return
  }
  func.func @transform_0(%arg0: i32, %arg1: i32) -> (i32, i32) {
    %c0_i32 = arith.constant 0 : i32
    %c0_i32_0 = arith.constant 0 : i32
    return %arg0, %c0_i32 : i32, i32
  }
  func.func @transform_1(%arg0: i32, %arg1: i32) -> (i32, i32) {
    %c0_i32 = arith.constant 0 : i32
    %c0_i32_0 = arith.constant 0 : i32
    return %c0_i32, %arg1 : i32, i32
  }
  func.func @transform_2(%arg0: i32, %arg1: i32) -> (i32, i32) {
    %c0_i32 = arith.constant 0 : i32
    %c0_i32_0 = arith.constant 0 : i32
    %c0_i32_1 = arith.constant 0 : i32
    return %c0_i32, %c0_i32_0 : i32, i32
  }
  func.func @transform_3(%arg0: i32, %arg1: i32) -> (i32, i32) {
    %c0_i32 = arith.constant 0 : i32
    %c0_i32_0 = arith.constant 0 : i32
    %c0_i32_1 = arith.constant 0 : i32
    return %c0_i32, %c0_i32_0 : i32, i32
  }
  func.func @transform_4(%arg0: i32, %arg1: i32) -> (i32, i32) {
    %c0_i32 = arith.constant 0 : i32
    return %arg0, %arg1 : i32, i32
  }
}

</mosaic_0001>

<llo_original>
// kernel: _lambda_.14
$region0: #{_lambda_.14}
  #allocation0 [shape = 'u32[]', space=smem, size = 0x4, offset = 0x4, fixed_abs, tag = 'smem constant byte address 0x4 - core index']
  #allocation1 [shape = 'u32[144,128]{1,0:T(1,128)}', space=vmem, size = 0x12000, scoped, tag = 'internal scratch']
  %s0 = inlined_call_operand.vmem [shape: f32[10,32], index: 0, kind: input, shape index: {}]
  %s1 = inlined_call_operand.vmem [shape: f32[1,32], index: 1, kind: input, shape index: {}]
  %s2 = inlined_call_operand.vmem [shape: f32[1,32], index: 2, kind: input, shape index: {}]
  %s3 = inlined_call_operand.vmem [shape: f32[10,32], index: 3, kind: output, shape index: {}]
  %s4 = sld [smem:[#allocation0]]
  $region22: #{_lambda_.14} parent=0
    _
  %s6 = ssub.s32 1, %s4
  %s7 = scalar_select 0, %s6, %s4
  // Predicated region
  $region2: #{_lambda_.14} parent=0 // pred_check
    _
  $region3: #{_lambda_.14} parent=0 // pred_check_branch
    %9 = sbr.rel (0) target = $region5
  $region4: #{_lambda_.14} parent=0 // pred_region
    _
  $region5: #{_lambda_.14} parent=0 // pred_fallthru
    _
  // Predicated region
  $region6: #{_lambda_.14} parent=0 // pred_check
    _
  $region7: #{_lambda_.14} parent=0 // pred_check_branch
    %11 = sbr.rel (0) target = $region9
  $region8: #{_lambda_.14} parent=0 // pred_region
    _
  $region9: #{_lambda_.14} parent=0 // pred_fallthru
    _
  // Predicated region
  $region10: #{_lambda_.14} parent=0 // pred_check
    _
  $region11: #{_lambda_.14} parent=0 // pred_check_branch
    %13 = sbr.rel (0) target = $region13
  $region12: #{_lambda_.14} parent=0 // pred_region
    _
  $region13: #{_lambda_.14} parent=0 // pred_fallthru
    _
  %v14 = vld [vmem:[%s0] sm:$0xff]
  %v15 = vld [vmem:[%s0 + $0x8] sm:$0x3]
  %vm16 = vcmask 261120
  %v17 = vsel %vm16, %v14, 0.0
  %18 = vadd.xlane.f32.xlu0 %v17
  %v19 = vpop.xlane.xlu0 %18
  %vm20 = vcmask 254976
  %v21 = vsel %vm20, %v15, 0.0
  %22 = vadd.xlane.f32.xlu0 %v21
  %v23 = vpop.xlane.xlu0 %22
  %v24 = vrcp.pop 32.0
  %v25 = vmul.f32 %v19, %v24
  %v26 = vmul.f32 %v23, %v24
  %v27 = vsub.f32 %v14, %v25
  %v28 = vsub.f32 %v15, %v26
  %v29 = vmul.f32 %v27, %v27
  %v30 = vmul.f32 %v28, %v28
  %v31 = vsel %vm16, %v29, 0.0
  %32 = vadd.xlane.f32.xlu0 %v31
  %v33 = vpop.xlane.xlu0 %32
  %v34 = vsel %vm20, %v30, 0.0
  %35 = vadd.xlane.f32.xlu0 %v34
  %v36 = vpop.xlane.xlu0 %35
  %v37 = vmul.f32 %v33, %v24
  %v38 = vmul.f32 %v36, %v24
  %v39 = vadd.f32 %v37, 1e-05
  %v40 = vadd.f32 %v38, 1e-05
  %v41 = vrsqrt.pop %v39
  %v42 = vrsqrt.pop %v40
  %v43 = vmul.f32 %v27, %v41
  %v44 = vmul.f32 %v28, %v42
  %v45 = vld [vmem:[%s1] sm:$0x1]
  %v47 = vlaneseq
  %v48 = vshrl.u32 %v47, 7
  %v49 = vsub.s32 0, %v48
  %v50 = vrot.slane %v45, %v49
  %v52 = vmul.f32 %v43, %v50
  %v53 = vmul.f32 %v44, %v50
  %v54 = vld [vmem:[%s2] sm:$0x1]
  %v56 = vlaneseq
  %v57 = vshrl.u32 %v56, 7
  %v58 = vsub.s32 0, %v57
  %v59 = vrot.slane %v54, %v58
  %v61 = vadd.f32 %v52, %v59
  %v62 = vadd.f32 %v53, %v59
  %63 = vst.msk [vmem:[%s3] sm:$0xff] %vm16, %v61
  %64 = vst.msk [vmem:[%s3 + $0x8] sm:$0x3] %vm20, %v62
  // Predicated region
  $region14: #{_lambda_.14} parent=0 // pred_check
    _
  $region15: #{_lambda_.14} parent=0 // pred_check_branch
    %66 = sbr.rel (0) target = $region17
  $region16: #{_lambda_.14} parent=0 // pred_region
    _
  $region17: #{_lambda_.14} parent=0 // pred_fallthru
    _
  // Predicated region
  $region18: #{_lambda_.14} parent=0 // pred_check
    _
  $region19: #{_lambda_.14} parent=0 // pred_check_branch
    %68 = sbr.rel (0) target = $region21
  $region20: #{_lambda_.14} parent=0 // pred_region
    _
  $region21: #{_lambda_.14} parent=0 // pred_fallthru
    _

// kernel: _lambda_.13
$region0: #{_lambda_.13}
  #allocation0 [shape = 'u32[]', space=smem, size = 0x4, offset = 0x4, fixed_abs, tag = 'smem constant byte address 0x4 - core index']
  #allocation1 [shape = 'u32[144,128]{1,0:T(1,128)}', space=vmem, size = 0x12000, scoped, tag = 'internal scratch']
  %s0 = inlined_call_operand.vmem [shape: f32[8,192], index: 0, kind: input, shape index: {}]
  %s1 = inlined_call_operand.vmem [shape: bf16[192,32], index: 1, kind: input, shape index: {}]
  %s2 = inlined_call_operand.vmem [shape: f32[8,32], index: 2, kind: output, shape index: {}]
  %s3 = sld [smem:[#allocation0]]
  $region18: #{_lambda_.13} parent=0
    _
  %s5 = ssub.s32 1, %s3
  %s6 = scalar_select 0, %s5, %s3
  // Predicated region
  $region2: #{_lambda_.13} parent=0 // pred_check
    _
  $region3: #{_lambda_.13} parent=0 // pred_check_branch
    %8 = sbr.rel (0) target = $region5
  $region4: #{_lambda_.13} parent=0 // pred_region
    _
  $region5: #{_lambda_.13} parent=0 // pred_fallthru
    _
  // Predicated region
  $region6: #{_lambda_.13} parent=0 // pred_check
    _
  $region7: #{_lambda_.13} parent=0 // pred_check_branch
    %10 = sbr.rel (0) target = $region9
  $region8: #{_lambda_.13} parent=0 // pred_region
    _
  $region9: #{_lambda_.13} parent=0 // pred_fallthru
    _
  %v12 = vld [vmem:[%s0] sm:$0xff]
  %v13 = vld [vmem:[%s0 + $0x8] sm:$0xff]
  %v14 = vpack.c.bf16 %v12, %v12
  %v15 = vpack.c.bf16 %v13, %v13
  %v16 = vld [vmem:[%s1] sm:$0xf]
  %v17 = vld [vmem:[%s1 + $0x4] sm:$0xf]
  %v18 = vld [vmem:[%s1 + $0x8] sm:$0xf]
  %v19 = vld [vmem:[%s1 + $0xc] sm:$0xf]
  %v20 = vld [vmem:[%s1 + $0x10] sm:$0xf]
  %v21 = vld [vmem:[%s1 + $0x14] sm:$0xf]
  %v22 = vld [vmem:[%s1 + $0x18] sm:$0xf]
  %v23 = vld [vmem:[%s1 + $0x1c] sm:$0xf]
  %v24 = vld [vmem:[%s1 + $0x20] sm:$0xf]
  %v25 = vld [vmem:[%s1 + $0x24] sm:$0xf]
  %v26 = vld [vmem:[%s1 + $0x28] sm:$0xf]
  %v27 = vld [vmem:[%s1 + $0x2c] sm:$0xf]
  %v28 = vld [vmem:[%s1 + $0x30] sm:$0xf]
  %v29 = vld [vmem:[%s1 + $0x34] sm:$0xf]
  %v30 = vld [vmem:[%s1 + $0x38] sm:$0xf]
  %v31 = vld [vmem:[%s1 + $0x3c] sm:$0xf]
  %v32 = vld [vmem:[%s1 + $0x40] sm:$0xf]
  %v33 = vld [vmem:[%s1 + $0x44] sm:$0xf]
  %v34 = vld [vmem:[%s1 + $0x48] sm:$0xf]
  %v35 = vld [vmem:[%s1 + $0x4c] sm:$0xf]
  %v36 = vld [vmem:[%s1 + $0x50] sm:$0xf]
  %v37 = vld [vmem:[%s1 + $0x54] sm:$0xf]
  %v38 = vld [vmem:[%s1 + $0x58] sm:$0xf]
  %v39 = vld [vmem:[%s1 + $0x5c] sm:$0xf]
  %v64 = vunpack.c.l.b16 %v16
  %v65 = vunpack.c.l.b16 %v17
  %v66 = vunpack.c.l.b16 %v18
  %v67 = vunpack.c.l.b16 %v19
  %v68 = vunpack.c.l.b16 %v20
  %v69 = vunpack.c.l.b16 %v21
  %v70 = vunpack.c.l.b16 %v22
  %v71 = vunpack.c.l.b16 %v23
  %v72 = vunpack.c.l.b16 %v24
  %v73 = vunpack.c.l.b16 %v25
  %v74 = vunpack.c.l.b16 %v26
  %v75 = vunpack.c.l.b16 %v27
  %v76 = vunpack.c.l.b16 %v28
  %v77 = vunpack.c.l.b16 %v29
  %v78 = vunpack.c.l.b16 %v30
  %v79 = vunpack.c.l.b16 %v31
  %v80 = vunpack.c.l.b16 %v32
  %v81 = vunpack.c.l.b16 %v33
  %v82 = vunpack.c.l.b16 %v34
  %v83 = vunpack.c.l.b16 %v35
  %v84 = vunpack.c.l.b16 %v36
  %v85 = vunpack.c.l.b16 %v37
  %v86 = vunpack.c.l.b16 %v38
  %v87 = vunpack.c.l.b16 %v39
  %v88 = vpack.c.b16 %v65, %v64
  %v89 = vpack.c.b16 %v67, %v66
  %v90 = vpack.c.b16 %v69, %v68
  %v91 = vpack.c.b16 %v71, %v70
  %v92 = vpack.c.b16 %v73, %v72
  %v93 = vpack.c.b16 %v75, %v74
  %v94 = vpack.c.b16 %v77, %v76
  %v95 = vpack.c.b16 %v79, %v78
  %v96 = vpack.c.b16 %v81, %v80
  %v97 = vpack.c.b16 %v83, %v82
  %v98 = vpack.c.b16 %v85, %v84
  %v99 = vpack.c.b16 %v87, %v86
  %vm112 = vcmask 523264
  %v114 = vsel %vm112, %v15, 0
  %116 = vmatprep.subr.bf16.mxu0 0
  %117 = vmatpush1.bf16.msra.mxu0 %v95
  %118 = vmatprep.subr.bf16.mxu0 0
  %119 = vmatpush1.bf16.msra.mxu0 %v94
  %120 = vmatprep.subr.bf16.mxu0 0
  %121 = vmatpush1.bf16.msra.mxu0 %v93
  %122 = vmatprep.subr.bf16.mxu0 0
  %123 = vmatpush1.bf16.msra.mxu0 %v92
  %124 = vmatprep.subr.bf16.mxu0 0
  %125 = vmatpush1.bf16.msra.mxu0 %v91
  %126 = vmatprep.subr.bf16.mxu0 0
  %127 = vmatpush1.bf16.msra.mxu0 %v90
  %128 = vmatprep.subr.bf16.mxu0 0
  %129 = vmatpush1.bf16.msra.mxu0 %v89
  %130 = vmatprep.subr.bf16.mxu0 0
  %131 = vmatpush1.bf16.msra.mxu0 %v88
  %132 = vmatprep.subr.bf16.mxu0 0
  %133 = vmatpush2.bf16.msra.mxu0 0
  %134 = vmatprep.subr.bf16.mxu0 0
  %135 = vmatpush2.bf16.msra.mxu0 0
  %136 = vmatprep.subr.bf16.mxu0 0
  %137 = vmatpush2.bf16.msra.mxu0 0
  %138 = vmatprep.subr.bf16.mxu0 0
  %139 = vmatpush2.bf16.msra.mxu0 0
  %140 = vmatprep.subr.bf16.mxu0 0
  %141 = vmatpush2.bf16.msra.mxu0 %v99
  %142 = vmatprep.subr.bf16.mxu0 0
  %143 = vmatpush2.bf16.msra.mxu0 %v98
  %144 = vmatprep.subr.bf16.mxu0 0
  %145 = vmatpush2.bf16.msra.mxu0 %v97
  %146 = vmatprep.subr.bf16.mxu0 0
  %147 = vmatpush2.bf16.msra.mxu0 %v96
  %148 = vmatprep.mubr.bf16.mxu0 %v114
  %149 = vmatmul.mubr.bf16.gmra.mxu0 %v14
  %v150 = vpop.f32.mrf.mxu0
  %v151 = vadd.f32 0.0, %v150
  %v152 = vpop.f32.mrf.mxu0
  %v153 = vpop.f32.mrf.mxu0
  %v154 = vpop.f32.mrf.mxu0
  %155 = vdwg.mxu0
  %vm156 = vcmask 261120
  %157 = vst.msk [vmem:[%s2] sm:$0xff] %vm156, %v151
  // Predicated region
  $region10: #{_lambda_.13} parent=0 // pred_check
    _
  $region11: #{_lambda_.13} parent=0 // pred_check_branch
    %159 = sbr.rel (0) target = $region13
  $region12: #{_lambda_.13} parent=0 // pred_region
    _
  $region13: #{_lambda_.13} parent=0 // pred_fallthru
    _
  // Predicated region
  $region14: #{_lambda_.13} parent=0 // pred_check
    _
  $region15: #{_lambda_.13} parent=0 // pred_check_branch
    %161 = sbr.rel (0) target = $region17
  $region16: #{_lambda_.13} parent=0 // pred_region
    _
  $region17: #{_lambda_.13} parent=0 // pred_fallthru
    _

// kernel: _lambda_.15
$region0: #{_lambda_.15}
  #allocation0 [shape = 'u32[]', space=smem, size = 0x4, offset = 0x4, fixed_abs, tag = 'smem constant byte address 0x4 - core index']
  #allocation1 [shape = 'u32[144,128]{1,0:T(1,128)}', space=vmem, size = 0x12000, scoped, tag = 'internal scratch']
  %s0 = inlined_call_operand.vmem [shape: f32[10,32], index: 0, kind: input, shape index: {}]
  %s1 = inlined_call_operand.vmem [shape: bf16[32,96], index: 1, kind: input, shape index: {}]
  %s2 = inlined_call_operand.vmem [shape: f32[1,96], index: 2, kind: input, shape index: {}]
  %s3 = inlined_call_operand.vmem [shape: f32[1,32], index: 3, kind: input, shape index: {}]
  %s4 = inlined_call_operand.vmem [shape: f32[1,32], index: 4, kind: input, shape index: {}]
  %s5 = inlined_call_operand.vmem [shape: f32[10,96], index: 5, kind: output, shape index: {}]
  %s6 = sld [smem:[#allocation0]]
  $region30: #{_lambda_.15} parent=0
    _
  %s8 = ssub.s32 1, %s6
  %s9 = scalar_select 0, %s8, %s6
  // Predicated region
  $region2: #{_lambda_.15} parent=0 // pred_check
    _
  $region3: #{_lambda_.15} parent=0 // pred_check_branch
    %11 = sbr.rel (0) target = $region5
  $region4: #{_lambda_.15} parent=0 // pred_region
    _
  $region5: #{_lambda_.15} parent=0 // pred_fallthru
    _
  // Predicated region
  $region6: #{_lambda_.15} parent=0 // pred_check
    _
  $region7: #{_lambda_.15} parent=0 // pred_check_branch
    %13 = sbr.rel (0) target = $region9
  $region8: #{_lambda_.15} parent=0 // pred_region
    _
  $region9: #{_lambda_.15} parent=0 // pred_fallthru
    _
  // Predicated region
  $region10: #{_lambda_.15} parent=0 // pred_check
    _
  $region11: #{_lambda_.15} parent=0 // pred_check_branch
    %15 = sbr.rel (0) target = $region13
  $region12: #{_lambda_.15} parent=0 // pred_region
    _
  $region13: #{_lambda_.15} parent=0 // pred_fallthru
    _
  // Predicated region
  $region14: #{_lambda_.15} parent=0 // pred_check
    _
  $region15: #{_lambda_.15} parent=0 // pred_check_branch
    %17 = sbr.rel (0) target = $region17
  $region16: #{_lambda_.15} parent=0 // pred_region
    _
  $region17: #{_lambda_.15} parent=0 // pred_fallthru
    _
  // Predicated region
  $region18: #{_lambda_.15} parent=0 // pred_check
    _
  $region19: #{_lambda_.15} parent=0 // pred_check_branch
    %19 = sbr.rel (0) target = $region21
  $region20: #{_lambda_.15} parent=0 // pred_region
    _
  $region21: #{_lambda_.15} parent=0 // pred_fallthru
    _
  %v21 = vld [vmem:[%s0] sm:$0xff]
  %v22 = vld [vmem:[%s0 + $0x8] sm:$0x3]
  %vm23 = vcmask 261120
  %v24 = vsel %vm23, %v21, 0.0
  %25 = vadd.xlane.f32.xlu0 %v24
  %v26 = vpop.xlane.xlu0 %25
  %vm27 = vcmask 254976
  %v28 = vsel %vm27, %v22, 0.0
  %29 = vadd.xlane.f32.xlu0 %v28
  %v30 = vpop.xlane.xlu0 %29
  %v31 = vrcp.pop 32.0
  %v32 = vmul.f32 %v26, %v31
  %v33 = vmul.f32 %v30, %v31
  %v34 = vsub.f32 %v21, %v32
  %v35 = vsub.f32 %v22, %v33
  %v36 = vmul.f32 %v34, %v34
  %v37 = vmul.f32 %v35, %v35
  %v38 = vsel %vm23, %v36, 0.0
  %39 = vadd.xlane.f32.xlu0 %v38
  %v40 = vpop.xlane.xlu0 %39
  %v41 = vsel %vm27, %v37, 0.0
  %42 = vadd.xlane.f32.xlu0 %v41
  %v43 = vpop.xlane.xlu0 %42
  %v44 = vmul.f32 %v40, %v31
  %v45 = vmul.f32 %v43, %v31
  %v46 = vadd.f32 %v44, 1e-05
  %v47 = vadd.f32 %v45, 1e-05
  %v48 = vrsqrt.pop %v46
  %v49 = vrsqrt.pop %v47
  %v50 = vmul.f32 %v34, %v48
  %v51 = vmul.f32 %v35, %v49
  %v52 = vld [vmem:[%s3] sm:$0x1]
  %v54 = vlaneseq
  %v55 = vshrl.u32 %v54, 7
  %v56 = vsub.s32 0, %v55
  %v57 = vrot.slane %v52, %v56
  %v59 = vmul.f32 %v50, %v57
  %v60 = vmul.f32 %v51, %v57
  %v61 = vld [vmem:[%s4] sm:$0x1]
  %v63 = vlaneseq
  %v64 = vshrl.u32 %v63, 7
  %v65 = vsub.s32 0, %v64
  %v66 = vrot.slane %v61, %v65
  %v68 = vadd.f32 %v59, %v66
  %v69 = vadd.f32 %v60, %v66
  %v70 = vpack.c.bf16 %v69, %v68
  %v71 = vld [vmem:[%s1] sm:$0xf]
  %v72 = vld [vmem:[%s1 + $0x4] sm:$0xf]
  %v73 = vld [vmem:[%s1 + $0x8] sm:$0xf]
  %v74 = vld [vmem:[%s1 + $0xc] sm:$0xf]
  %v75 = vld [vmem:[%s2] sm:$0x1]
  %v77 = vlaneseq
  %v78 = vshrl.u32 %v77, 7
  %v79 = vsub.s32 0, %v78
  %v80 = vrot.slane %v75, %v79
  %v86 = vunpack.c.l.b16 %v71
  %v87 = vunpack.c.l.b16 %v72
  %v88 = vunpack.c.l.b16 %v73
  %v89 = vunpack.c.l.b16 %v74
  %v90 = vpack.c.b16 %v87, %v86
  %v91 = vpack.c.b16 %v89, %v88
  %v95 = vsel %vm23, %v70, 0
  %97 = vmatprep.subr.bf16.mxu0 0
  %98 = vmatpush1.bf16.msra.mxu0 0
  %99 = vmatprep.subr.bf16.mxu0 0
  %100 = vmatpush1.bf16.msra.mxu0 0
  %101 = vmatprep.subr.bf16.mxu0 0
  %102 = vmatpush1.bf16.msra.mxu0 0
  %103 = vmatprep.subr.bf16.mxu0 0
  %104 = vmatpush1.bf16.msra.mxu0 0
  %105 = vmatprep.subr.bf16.mxu0 0
  %106 = vmatpush1.bf16.msra.mxu0 0
  %107 = vmatprep.subr.bf16.mxu0 0
  %108 = vmatpush1.bf16.msra.mxu0 0
  %109 = vmatprep.subr.bf16.mxu0 0
  %110 = vmatpush1.bf16.msra.mxu0 %v91
  %111 = vmatprep.subr.bf16.mxu0 0
  %112 = vmatpush1.bf16.msra.mxu0 %v90
  %113 = vmatprep.subr.bf16.mxu0 0
  %114 = vmatpush2.bf16.msra.mxu0 0
  %115 = vmatprep.subr.bf16.mxu0 0
  %116 = vmatpush2.bf16.msra.mxu0 0
  %117 = vmatprep.subr.bf16.mxu0 0
  %118 = vmatpush2.bf16.msra.mxu0 0
  %119 = vmatprep.subr.bf16.mxu0 0
  %120 = vmatpush2.bf16.msra.mxu0 0
  %121 = vmatprep.subr.bf16.mxu0 0
  %122 = vmatpush2.bf16.msra.mxu0 0
  %123 = vmatprep.subr.bf16.mxu0 0
  %124 = vmatpush2.bf16.msra.mxu0 0
  %125 = vmatprep.subr.bf16.mxu0 0
  %126 = vmatpush2.bf16.msra.mxu0 0
  %127 = vmatprep.subr.bf16.mxu0 0
  %128 = vmatpush2.bf16.msra.mxu0 0
  %129 = vmatprep.mubr.bf16.mxu0 0
  %130 = vmatmul.mubr.bf16.gmra.mxu0 %v95
  %v131 = vpop.f32.mrf.mxu0
  %v132 = vadd.f32 %v80, %v131
  %v133 = vpop.f32.mrf.mxu0
  %v134 = vpop.f32.mrf.mxu0
  %v135 = vadd.f32 %v80, %v134
  %v136 = vpop.f32.mrf.mxu0
  %137 = vdwg.mxu0
  %vm138 = vcmask 785408
  %139 = vst.msk [vmem:[%s5] sm:$0xff] %vm138, %v132
  %vm140 = vcmask 779264
  %141 = vst.msk [vmem:[%s5 + $0x8] sm:$0x3] %vm140, %v135
  // Predicated region
  $region22: #{_lambda_.15} parent=0 // pred_check
    _
  $region23: #{_lambda_.15} parent=0 // pred_check_branch
    %143 = sbr.rel (0) target = $region25
  $region24: #{_lambda_.15} parent=0 // pred_region
    _
  $region25: #{_lambda_.15} parent=0 // pred_fallthru
    _
  // Predicated region
  $region26: #{_lambda_.15} parent=0 // pred_check
    _
  $region27: #{_lambda_.15} parent=0 // pred_check_branch
    %145 = sbr.rel (0) target = $region29
  $region28: #{_lambda_.15} parent=0 // pred_region
    _
  $region29: #{_lambda_.15} parent=0 // pred_fallthru
    _

// kernel: _lambda_.16
$region0: #{_lambda_.16}
  #allocation0 [shape = 'u32[]', space=smem, size = 0x4, offset = 0x4, fixed_abs, tag = 'smem constant byte address 0x4 - core index']
  #allocation1 [shape = 'u32[144,128]{1,0:T(1,128)}', space=vmem, size = 0x12000, scoped, tag = 'internal scratch']
  %s0 = inlined_call_operand.vmem [shape: f32[2,5,96], index: 0, kind: input, shape index: {}]
  %s1 = inlined_call_operand.vmem [shape: f32[2,5,32], index: 1, kind: output, shape index: {0}]
  %s2 = inlined_call_operand.vmem [shape: f32[2,5,5], index: 2, kind: output, shape index: {1}]
  %3 = xla_tuple %s1, %s2
  %s4 = sld [smem:[#allocation0]]
  $region45: #{_lambda_.16} parent=0
    _
  %s6 = ssub.s32 1, %s4
  %s7 = scalar_select 0, %s6, %s4
  loop: start=0, step=1, limit=4
  $region2: #{_lambda_.16} parent=0 // loop_pre_header
    _
  $region3: #{_lambda_.16} parent=0 // loop_header
    %s9 = sphi 0, %s13
    %p10 = scmp.ge.s32.totalorder %s9, 4
    %s19 = sphi 0, %s21
    %s22 = sphi 0, %s19
    %s23 = sphi 0, %s22
    %s39 = sphi 0, %s23
    %s45 = sphi 0, %s47
    %s48 = sphi 0, %s45
    %s49 = sphi 0, %s48
    %s65 = sphi 0, %s49
    %s71 = sphi 0, %s73
    %s74 = sphi 0, %s71
    %s75 = sphi 0, %s74
    %s91 = sphi 0, %s75
  $region4: #{_lambda_.16} parent=0 // loop_header_branch
    %12 = sbr.rel (%p10) target = $region8
  $region5: #{_lambda_.16} parent=0 // loop_body
    %s14 = ssub.s32 %s9, 1
    %s15 = ssub.s32 %s9, 2
    %s16 = sadd.s32 %s9, 1
    %s17 = ssub.s32 %s9, %s16
    %p18 = scmp.eq.s32.totalorder %s17, 0
    %s20 = sadd.s32 %s19, 1
    %s21 = scalar_select %p18, %s19, %s20
    %p24 = pneg %p18
    %p25 = scmp.eq.s32.totalorder %s9, 1
    %p26 = por %p24, %p25
    %p27 = scmp.ne.s32.totalorder %s19, %s22
    %p28 = scmp.eq.s32.totalorder %s9, 0
    %p29 = por %p27, %p28
    %p30 = scmp.ne.s32.totalorder %s19, %s22
    %p31 = scmp.eq.s32.totalorder %s14, 1
    %p32 = por %p30, %p31
    %p33 = scmp.ne.s32.totalorder %s22, %s23
    %p34 = scmp.eq.s32.totalorder %s14, 0
    %p35 = por %p33, %p34
    %p36 = scmp.ne.s32.totalorder %s22, %s23
    %p37 = scmp.eq.s32.totalorder %s15, 1
    %p38 = por %p36, %p37
    %p40 = scmp.ne.s32.totalorder %s23, %s39
    %p41 = scmp.eq.s32.totalorder %s15, 0
    %p42 = por %p40, %p41
    %s43 = ssub.s32 %s9, %s16
    %p44 = scmp.eq.s32.totalorder %s43, 0
    %s46 = sadd.s32 %s45, 1
    %s47 = scalar_select %p44, %s45, %s46
    %p50 = pneg %p44
    %p51 = scmp.eq.s32.totalorder %s9, 1
    %p52 = por %p50, %p51
    %p53 = scmp.ne.s32.totalorder %s45, %s48
    %p54 = scmp.eq.s32.totalorder %s9, 0
    %p55 = por %p53, %p54
    %p56 = scmp.ne.s32.totalorder %s45, %s48
    %p57 = scmp.eq.s32.totalorder %s14, 1
    %p58 = por %p56, %p57
    %p59 = scmp.ne.s32.totalorder %s48, %s49
    %p60 = scmp.eq.s32.totalorder %s14, 0
    %p61 = por %p59, %p60
    %p62 = scmp.ne.s32.totalorder %s48, %s49
    %p63 = scmp.eq.s32.totalorder %s15, 1
    %p64 = por %p62, %p63
    %p66 = scmp.ne.s32.totalorder %s49, %s65
    %p67 = scmp.eq.s32.totalorder %s15, 0
    %p68 = por %p66, %p67
    %s69 = ssub.s32 %s9, %s16
    %p70 = scmp.eq.s32.totalorder %s69, 0
    %s72 = sadd.s32 %s71, 1
    %s73 = scalar_select %p70, %s71, %s72
    %p76 = pneg %p70
    %p77 = scmp.eq.s32.totalorder %s9, 1
    %p78 = por %p76, %p77
    %p79 = scmp.ne.s32.totalorder %s71, %s74
    %p80 = scmp.eq.s32.totalorder %s9, 0
    %p81 = por %p79, %p80
    %p82 = scmp.ne.s32.totalorder %s71, %s74
    %p83 = scmp.eq.s32.totalorder %s14, 1
    %p84 = por %p82, %p83
    %p85 = scmp.ne.s32.totalorder %s74, %s75
    %p86 = scmp.eq.s32.totalorder %s14, 0
    %p87 = por %p85, %p86
    %p88 = scmp.ne.s32.totalorder %s74, %s75
    %p89 = scmp.eq.s32.totalorder %s15, 1
    %p90 = por %p88, %p89
    %p92 = scmp.ne.s32.totalorder %s75, %s91
    %p93 = scmp.eq.s32.totalorder %s15, 0
    %p94 = por %p92, %p93
    %p95 = scmp.le.s32.totalorder 1, %s9
    %p96 = scmp.lt.s32.totalorder %s9, 3
    %p97 = pnand %p95, %p96
    %p98 = pneg %p97
    // Predicated region
    $region9: #{_lambda_.16} parent=5 // pred_check
      _
    $region10: #{_lambda_.16} parent=5 // pred_check_branch
      %100 = sbr.rel (%p97) target = $region12
    $region11: #{_lambda_.16} parent=5 // pred_region
      %s101 = ssub.s32 %s9, 1
    $region12: #{_lambda_.16} parent=5 // pred_fallthru
      _
    %p102 = scmp.lt.s32.totalorder %s9, 2
    // Predicated region
    $region13: #{_lambda_.16} parent=5 // pred_check
      %p103 = pneg %p102
    $region14: #{_lambda_.16} parent=5 // pred_check_branch
      %105 = sbr.rel (%p103) target = $region16
    $region15: #{_lambda_.16} parent=5 // pred_region
      // Predicated region
      $region17: #{_lambda_.16} parent=15 // pred_check
        %p106 = pneg %p29
      $region18: #{_lambda_.16} parent=15 // pred_check_branch
        %108 = sbr.rel (%p106) target = $region20
      $region19: #{_lambda_.16} parent=15 // pred_region
        %p109 = scmp.lt.s32.totalorder %s9, 1
        %s110 = scalar_select %p109, %s9, 1
        %s111 = smul.addr %s110, 8
        %s112 = scalar_lea.vmem %s0, %s111
      $region20: #{_lambda_.16} parent=15 // pred_fallthru
        _
    $region16: #{_lambda_.16} parent=5 // pred_fallthru
      _
    %p113 = scmp.le.s32.totalorder 1, %s9
    %p114 = scmp.lt.s32.totalorder %s9, 3
    %p115 = pnand %p113, %p114
    %p116 = pneg %p115
    // Predicated region
    $region21: #{_lambda_.16} parent=5 // pred_check
      _
    $region22: #{_lambda_.16} parent=5 // pred_check_branch
      %118 = sbr.rel (%p115) target = $region24
    $region23: #{_lambda_.16} parent=5 // pred_region
      %s119 = ssub.s32 %s9, 1
      %p120 = scmp.lt.s32.totalorder %s14, 1
      %s121 = scalar_select %p120, %s14, 1
      %s122 = smul.addr %s121, 8
      %s123 = scalar_lea.vmem %s0, %s122
      %p124 = pneg %p35
      %p125 = pneg %p32
      %p126 = pneg %p61
      %p127 = pneg %p58
      %p128 = scmp.lt.s32.totalorder %s14, 1
      %s129 = scalar_select %p128, %s14, 1
      %s130 = smul.addr %s129, 8
      %s131 = scalar_lea.vmem %s1, %s130
      %p132 = pneg %p87
      %p133 = pneg %p84
      %p134 = scmp.lt.s32.totalorder %s14, 1
      %s135 = scalar_select %p134, %s14, 1
      %s136 = smul.addr %s135, 8
      %s137 = scalar_lea.vmem %s2, %s136
      %p138 = scmp.lt.s32.totalorder %s14, 1
      %s139 = scalar_select %p138, %s14, 1
      %s140 = smul.addr %s139, 8
      %s141 = scalar_lea.vmem %s0, %s140
      %p142 = scmp.lt.s32.totalorder %s14, 1
      %s143 = scalar_select %p142, %s14, 1
      %s144 = smul.addr %s143, 8
      %s145 = scalar_lea.vmem %s1, %s144
      %p146 = scmp.lt.s32.totalorder %s14, 1
      %s147 = scalar_select %p146, %s14, 1
      %s148 = smul.addr %s147, 8
      %s149 = scalar_lea.vmem %s2, %s148
      %v151 = vld [vmem:[%s141] sm:$0x1f]
      %v152 = vmul.f32 %v151, 0.35355338
      %v153 = vpack.c.bf16 %v152, %v152
      %v154 = vpack.c.bf16 %v151, %v151
      %156 = vrot.lane.b32.xlu0 %v154, 96
      %v157 = vpop.permute.xlu0 %156
      %vm158 = vcmask 64512
      %v160 = vsel %vm158, %v153, 0
      %v163 = vsel %vm158, %v157, 0
      %165 = vmatprep.subr.bf16.mxu0 0
      %166 = vmatpush1.bf16.xpose.msra.mxu0 0
      %167 = vmatprep.subr.bf16.mxu0 0
      %168 = vmatpush1.bf16.xpose.msra.mxu0 0
      %169 = vmatprep.subr.bf16.mxu0 0
      %170 = vmatpush1.bf16.xpose.msra.mxu0 0
      %171 = vmatprep.subr.bf16.mxu0 0
      %172 = vmatpush1.bf16.xpose.msra.mxu0 0
      %173 = vmatprep.subr.bf16.mxu0 0
      %174 = vmatpush1.bf16.xpose.msra.mxu0 0
      %175 = vmatprep.subr.bf16.mxu0 0
      %176 = vmatpush1.bf16.xpose.msra.mxu0 0
      %177 = vmatprep.subr.bf16.mxu0 0
      %178 = vmatpush1.bf16.xpose.msra.mxu0 0
      %179 = vmatprep.subr.bf16.mxu0 0
      %180 = vmatpush1.bf16.xpose.msra.mxu0 %v163
      %181 = vmatprep.subr.bf16.mxu0 0
      %182 = vmatpush2.bf16.xpose.msra.mxu0 0
      %183 = vmatprep.subr.bf16.mxu0 0
      %184 = vmatpush2.bf16.xpose.msra.mxu0 0
      %185 = vmatprep.subr.bf16.mxu0 0
      %186 = vmatpush2.bf16.xpose.msra.mxu0 0
      %187 = vmatprep.subr.bf16.mxu0 0
      %188 = vmatpush2.bf16.xpose.msra.mxu0 0
      %189 = vmatprep.subr.bf16.mxu0 0
      %190 = vmatpush2.bf16.xpose.msra.mxu0 0
      %191 = vmatprep.subr.bf16.mxu0 0
      %192 = vmatpush2.bf16.xpose.msra.mxu0 0
      %193 = vmatprep.subr.bf16.mxu0 0
      %194 = vmatpush2.bf16.xpose.msra.mxu0 0
      %195 = vmatprep.subr.bf16.mxu0 0
      %196 = vmatpush2.bf16.xpose.msra.mxu0 0
      %197 = vmatprep.mubr.bf16.mxu0 0
      %198 = vmatmul.mubr.bf16.gmra.mxu0 %v160
      %v199 = vpop.f32.mrf.mxu0
      %v200 = vadd.f32 0.0, %v199
      %v201 = vpop.f32.mrf.mxu0
      %v202 = vpop.f32.mrf.mxu0
      %v203 = vpop.f32.mrf.mxu0
      %204 = vdwg.mxu0
      %vm205 = vcmask 36864
      %v206 = vsel %vm205, %v200, -inf
      %207 = vmax.xlane.f32.xlu0 %v206
      %v208 = vpop.xlane.xlu0 %207
      %v209 = vsub.f32 %v200, %v208
      %v210 = vmul.f32 %v209, 1.442695
      %v211 = vpow.pop %v210
      %v212 = vsel %vm205, %v211, 0.0
      %213 = vadd.xlane.f32.xlu0 %v212
      %v214 = vpop.xlane.xlu0 %213
      %v215 = vrcp.pop %v214
      %v216 = vmul.f32 %v211, %v215
      %v217 = vpack.c.bf16 %v216, %v216
      %218 = vrot.lane.b32.xlu0 %v154, 64
      %v219 = vpop.permute.xlu0 %218
      %vm220 = vcmask 39936
      %v222 = vsel %vm220, %v217, 0
      %vm224 = vcmask 1041408
      %vm225 = vcmask 1042432
      %v226 = vsel %vm224, 4294967295, 65535
      %v227 = vsel %vm225, %v226, 0
      %v229 = vand.u32 %v219, %v227
      %231 = vmatprep.subr.bf16.mxu0 0
      %232 = vmatpush1.bf16.msra.mxu0 0
      %233 = vmatprep.subr.bf16.mxu0 0
      %234 = vmatpush1.bf16.msra.mxu0 0
      %235 = vmatprep.subr.bf16.mxu0 0
      %236 = vmatpush1.bf16.msra.mxu0 0
      %237 = vmatprep.subr.bf16.mxu0 0
      %238 = vmatpush1.bf16.msra.mxu0 0
      %239 = vmatprep.subr.bf16.mxu0 0
      %240 = vmatpush1.bf16.msra.mxu0 0
      %241 = vmatprep.subr.bf16.mxu0 0
      %242 = vmatpush1.bf16.msra.mxu0 0
      %243 = vmatprep.subr.bf16.mxu0 0
      %244 = vmatpush1.bf16.msra.mxu0 0
      %245 = vmatprep.subr.bf16.mxu0 0
      %246 = vmatpush1.bf16.msra.mxu0 %v229
      %247 = vmatprep.subr.bf16.mxu0 0
      %248 = vmatpush2.bf16.msra.mxu0 0
      %249 = vmatprep.subr.bf16.mxu0 0
      %250 = vmatpush2.bf16.msra.mxu0 0
      %251 = vmatprep.subr.bf16.mxu0 0
      %252 = vmatpush2.bf16.msra.mxu0 0
      %253 = vmatprep.subr.bf16.mxu0 0
      %254 = vmatpush2.bf16.msra.mxu0 0
      %255 = vmatprep.subr.bf16.mxu0 0
      %256 = vmatpush2.bf16.msra.mxu0 0
      %257 = vmatprep.subr.bf16.mxu0 0
      %258 = vmatpush2.bf16.msra.mxu0 0
      %259 = vmatprep.subr.bf16.mxu0 0
      %260 = vmatpush2.bf16.msra.mxu0 0
      %261 = vmatprep.subr.bf16.mxu0 0
      %262 = vmatpush2.bf16.msra.mxu0 0
      %263 = vmatprep.mubr.bf16.mxu0 0
      %264 = vmatmul.mubr.bf16.gmra.mxu0 %v222
      %v265 = vpop.f32.mrf.mxu0
      %v266 = vadd.f32 0.0, %v265
      %v267 = vpop.f32.mrf.mxu0
      %v268 = vpop.f32.mrf.mxu0
      %v269 = vpop.f32.mrf.mxu0
      %270 = vdwg.mxu0
      %vm271 = vcmask 61440
      %272 = vst.msk [vmem:[%s145] sm:$0x1f] %vm271, %v266
      %v273 = vadd.f32 %v216, 0.0
      %275 = vrot.lane.b32.xlu0 %v153, 120
      %v276 = vpop.permute.xlu0 %275
      %277 = vrot.lane.b32.xlu0 %v154, 88
      %v278 = vpop.permute.xlu0 %277
      %v280 = vsel %vm158, %v276, 0
      %v283 = vsel %vm158, %v278, 0
      %285 = vmatprep.subr.bf16.mxu0 0
      %286 = vmatpush1.bf16.xpose.msra.mxu0 0
      %287 = vmatprep.subr.bf16.mxu0 0
      %288 = vmatpush1.bf16.xpose.msra.mxu0 0
      %289 = vmatprep.subr.bf16.mxu0 0
      %290 = vmatpush1.bf16.xpose.msra.mxu0 0
      %291 = vmatprep.subr.bf16.mxu0 0
      %292 = vmatpush1.bf16.xpose.msra.mxu0 0
      %293 = vmatprep.subr.bf16.mxu0 0
      %294 = vmatpush1.bf16.xpose.msra.mxu0 0
      %295 = vmatprep.subr.bf16.mxu0 0
      %296 = vmatpush1.bf16.xpose.msra.mxu0 0
      %297 = vmatprep.subr.bf16.mxu0 0
      %298 = vmatpush1.bf16.xpose.msra.mxu0 0
      %299 = vmatprep.subr.bf16.mxu0 0
      %300 = vmatpush1.bf16.xpose.msra.mxu0 %v283
      %301 = vmatprep.subr.bf16.mxu0 0
      %302 = vmatpush2.bf16.xpose.msra.mxu0 0
      %303 = vmatprep.subr.bf16.mxu0 0
      %304 = vmatpush2.bf16.xpose.msra.mxu0 0
      %305 = vmatprep.subr.bf16.mxu0 0
      %306 = vmatpush2.bf16.xpose.msra.mxu0 0
      %307 = vmatprep.subr.bf16.mxu0 0
      %308 = vmatpush2.bf16.xpose.msra.mxu0 0
      %309 = vmatprep.subr.bf16.mxu0 0
      %310 = vmatpush2.bf16.xpose.msra.mxu0 0
      %311 = vmatprep.subr.bf16.mxu0 0
      %312 = vmatpush2.bf16.xpose.msra.mxu0 0
      %313 = vmatprep.subr.bf16.mxu0 0
      %314 = vmatpush2.bf16.xpose.msra.mxu0 0
      %315 = vmatprep.subr.bf16.mxu0 0
      %316 = vmatpush2.bf16.xpose.msra.mxu0 0
      %317 = vmatprep.mubr.bf16.mxu0 0
      %318 = vmatmul.mubr.bf16.gmra.mxu0 %v280
      %v319 = vpop.f32.mrf.mxu0
      %v320 = vadd.f32 0.0, %v319
      %v321 = vpop.f32.mrf.mxu0
      %v322 = vpop.f32.mrf.mxu0
      %v323 = vpop.f32.mrf.mxu0
      %324 = vdwg.mxu0
      %v325 = vsel %vm205, %v320, -inf
      %326 = vmax.xlane.f32.xlu0 %v325
      %v327 = vpop.xlane.xlu0 %326
      %v328 = vsub.f32 %v320, %v327
      %v329 = vmul.f32 %v328, 1.442695
      %v330 = vpow.pop %v329
      %v331 = vsel %vm205, %v330, 0.0
      %332 = vadd.xlane.f32.xlu0 %v331
      %v333 = vpop.xlane.xlu0 %332
      %v334 = vrcp.pop %v333
      %v335 = vmul.f32 %v330, %v334
      %v336 = vpack.c.bf16 %v335, %v335
      %337 = vrot.lane.b32.xlu0 %v154, 56
      %v338 = vpop.permute.xlu0 %337
      %v340 = vsel %vm220, %v336, 0
      %v343 = vand.u32 %v338, %v227
      %345 = vmatprep.subr.bf16.mxu0 0
      %346 = vmatpush1.bf16.msra.mxu0 0
      %347 = vmatprep.subr.bf16.mxu0 0
      %348 = vmatpush1.bf16.msra.mxu0 0
      %349 = vmatprep.subr.bf16.mxu0 0
      %350 = vmatpush1.bf16.msra.mxu0 0
      %351 = vmatprep.subr.bf16.mxu0 0
      %352 = vmatpush1.bf16.msra.mxu0 0
      %353 = vmatprep.subr.bf16.mxu0 0
      %354 = vmatpush1.bf16.msra.mxu0 0
      %355 = vmatprep.subr.bf16.mxu0 0
      %356 = vmatpush1.bf16.msra.mxu0 0
      %357 = vmatprep.subr.bf16.mxu0 0
      %358 = vmatpush1.bf16.msra.mxu0 0
      %359 = vmatprep.subr.bf16.mxu0 0
      %360 = vmatpush1.bf16.msra.mxu0 %v343
      %361 = vmatprep.subr.bf16.mxu0 0
      %362 = vmatpush2.bf16.msra.mxu0 0
      %363 = vmatprep.subr.bf16.mxu0 0
      %364 = vmatpush2.bf16.msra.mxu0 0
      %365 = vmatprep.subr.bf16.mxu0 0
      %366 = vmatpush2.bf16.msra.mxu0 0
      %367 = vmatprep.subr.bf16.mxu0 0
      %368 = vmatpush2.bf16.msra.mxu0 0
      %369 = vmatprep.subr.bf16.mxu0 0
      %370 = vmatpush2.bf16.msra.mxu0 0
      %371 = vmatprep.subr.bf16.mxu0 0
      %372 = vmatpush2.bf16.msra.mxu0 0
      %373 = vmatprep.subr.bf16.mxu0 0
      %374 = vmatpush2.bf16.msra.mxu0 0
      %375 = vmatprep.subr.bf16.mxu0 0
      %376 = vmatpush2.bf16.msra.mxu0 0
      %377 = vmatprep.mubr.bf16.mxu0 0
      %378 = vmatmul.mubr.bf16.gmra.mxu0 %v340
      %v379 = vpop.f32.mrf.mxu0
      %v380 = vadd.f32 0.0, %v379
      %v381 = vpop.f32.mrf.mxu0
      %v382 = vpop.f32.mrf.mxu0
      %v383 = vpop.f32.mrf.mxu0
      %384 = vdwg.mxu0
      %386 = vrot.lane.b32.xlu0 %v380, 8
      %v387 = vpop.permute.xlu0 %386
      %vm389 = vcmask 127040
      %390 = vst.msk [vmem:[%s145] sm:$0x1f] %vm389, %v387
      %v391 = vadd.f32 %v273, %v335
      %392 = vrot.lane.b32.xlu0 %v153, 112
      %v393 = vpop.permute.xlu0 %392
      %394 = vrot.lane.b32.xlu0 %v154, 80
      %v395 = vpop.permute.xlu0 %394
      %v397 = vsel %vm158, %v393, 0
      %v400 = vsel %vm158, %v395, 0
      %402 = vmatprep.subr.bf16.mxu0 0
      %403 = vmatpush1.bf16.xpose.msra.mxu0 0
      %404 = vmatprep.subr.bf16.mxu0 0
      %405 = vmatpush1.bf16.xpose.msra.mxu0 0
      %406 = vmatprep.subr.bf16.mxu0 0
      %407 = vmatpush1.bf16.xpose.msra.mxu0 0
      %408 = vmatprep.subr.bf16.mxu0 0
      %409 = vmatpush1.bf16.xpose.msra.mxu0 0
      %410 = vmatprep.subr.bf16.mxu0 0
      %411 = vmatpush1.bf16.xpose.msra.mxu0 0
      %412 = vmatprep.subr.bf16.mxu0 0
      %413 = vmatpush1.bf16.xpose.msra.mxu0 0
      %414 = vmatprep.subr.bf16.mxu0 0
      %415 = vmatpush1.bf16.xpose.msra.mxu0 0
      %416 = vmatprep.subr.bf16.mxu0 0
      %417 = vmatpush1.bf16.xpose.msra.mxu0 %v400
      %418 = vmatprep.subr.bf16.mxu0 0
      %419 = vmatpush2.bf16.xpose.msra.mxu0 0
      %420 = vmatprep.subr.bf16.mxu0 0
      %421 = vmatpush2.bf16.xpose.msra.mxu0 0
      %422 = vmatprep.subr.bf16.mxu0 0
      %423 = vmatpush2.bf16.xpose.msra.mxu0 0
      %424 = vmatprep.subr.bf16.mxu0 0
      %425 = vmatpush2.bf16.xpose.msra.mxu0 0
      %426 = vmatprep.subr.bf16.mxu0 0
      %427 = vmatpush2.bf16.xpose.msra.mxu0 0
      %428 = vmatprep.subr.bf16.mxu0 0
      %429 = vmatpush2.bf16.xpose.msra.mxu0 0
      %430 = vmatprep.subr.bf16.mxu0 0
      %431 = vmatpush2.bf16.xpose.msra.mxu0 0
      %432 = vmatprep.subr.bf16.mxu0 0
      %433 = vmatpush2.bf16.xpose.msra.mxu0 0
      %434 = vmatprep.mubr.bf16.mxu0 0
      %435 = vmatmul.mubr.bf16.gmra.mxu0 %v397
      %v436 = vpop.f32.mrf.mxu0
      %v437 = vadd.f32 0.0, %v436
      %v438 = vpop.f32.mrf.mxu0
      %v439 = vpop.f32.mrf.mxu0
      %v440 = vpop.f32.mrf.mxu0
      %441 = vdwg.mxu0
      %v442 = vsel %vm205, %v437, -inf
      %443 = vmax.xlane.f32.xlu0 %v442
      %v444 = vpop.xlane.xlu0 %443
      %v445 = vsub.f32 %v437, %v444
      %v446 = vmul.f32 %v445, 1.442695
      %v447 = vpow.pop %v446
      %v448 = vsel %vm205, %v447, 0.0
      %449 = vadd.xlane.f32.xlu0 %v448
      %v450 = vpop.xlane.xlu0 %449
      %v451 = vrcp.pop %v450
      %v452 = vmul.f32 %v447, %v451
      %v453 = vpack.c.bf16 %v452, %v452
      %454 = vrot.lane.b32.xlu0 %v154, 48
      %v455 = vpop.permute.xlu0 %454
      %v457 = vsel %vm220, %v453, 0
      %v460 = vand.u32 %v455, %v227
      %462 = vmatprep.subr.bf16.mxu0 0
      %463 = vmatpush1.bf16.msra.mxu0 0
      %464 = vmatprep.subr.bf16.mxu0 0
      %465 = vmatpush1.bf16.msra.mxu0 0
      %466 = vmatprep.subr.bf16.mxu0 0
      %467 = vmatpush1.bf16.msra.mxu0 0
      %468 = vmatprep.subr.bf16.mxu0 0
      %469 = vmatpush1.bf16.msra.mxu0 0
      %470 = vmatprep.subr.bf16.mxu0 0
      %471 = vmatpush1.bf16.msra.mxu0 0
      %472 = vmatprep.subr.bf16.mxu0 0
      %473 = vmatpush1.bf16.msra.mxu0 0
      %474 = vmatprep.subr.bf16.mxu0 0
      %475 = vmatpush1.bf16.msra.mxu0 0
      %476 = vmatprep.subr.bf16.mxu0 0
      %477 = vmatpush1.bf16.msra.mxu0 %v460
      %478 = vmatprep.subr.bf16.mxu0 0
      %479 = vmatpush2.bf16.msra.mxu0 0
      %480 = vmatprep.subr.bf16.mxu0 0
      %481 = vmatpush2.bf16.msra.mxu0 0
      %482 = vmatprep.subr.bf16.mxu0 0
      %483 = vmatpush2.bf16.msra.mxu0 0
      %484 = vmatprep.subr.bf16.mxu0 0
      %485 = vmatpush2.bf16.msra.mxu0 0
      %486 = vmatprep.subr.bf16.mxu0 0
      %487 = vmatpush2.bf16.msra.mxu0 0
      %488 = vmatprep.subr.bf16.mxu0 0
      %489 = vmatpush2.bf16.msra.mxu0 0
      %490 = vmatprep.subr.bf16.mxu0 0
      %491 = vmatpush2.bf16.msra.mxu0 0
      %492 = vmatprep.subr.bf16.mxu0 0
      %493 = vmatpush2.bf16.msra.mxu0 0
      %494 = vmatprep.mubr.bf16.mxu0 0
      %495 = vmatmul.mubr.bf16.gmra.mxu0 %v457
      %v496 = vpop.f32.mrf.mxu0
      %v497 = vadd.f32 0.0, %v496
      %v498 = vpop.f32.mrf.mxu0
      %v499 = vpop.f32.mrf.mxu0
      %v500 = vpop.f32.mrf.mxu0
      %501 = vdwg.mxu0
      %503 = vrot.lane.b32.xlu0 %v497, 16
      %v504 = vpop.permute.xlu0 %503
      %vm506 = vcmask 192640
      %507 = vst.msk [vmem:[%s145] sm:$0x1f] %vm506, %v504
      %v508 = vadd.f32 %v391, %v452
      %509 = vrot.lane.b32.xlu0 %v153, 104
      %v510 = vpop.permute.xlu0 %509
      %511 = vrot.lane.b32.xlu0 %v154, 72
      %v512 = vpop.permute.xlu0 %511
      %v514 = vsel %vm158, %v510, 0
      %v517 = vsel %vm158, %v512, 0
      %519 = vmatprep.subr.bf16.mxu0 0
      %520 = vmatpush1.bf16.xpose.msra.mxu0 0
      %521 = vmatprep.subr.bf16.mxu0 0
      %522 = vmatpush1.bf16.xpose.msra.mxu0 0
      %523 = vmatprep.subr.bf16.mxu0 0
      %524 = vmatpush1.bf16.xpose.msra.mxu0 0
      %525 = vmatprep.subr.bf16.mxu0 0
      %526 = vmatpush1.bf16.xpose.msra.mxu0 0
      %527 = vmatprep.subr.bf16.mxu0 0
      %528 = vmatpush1.bf16.xpose.msra.mxu0 0
      %529 = vmatprep.subr.bf16.mxu0 0
      %530 = vmatpush1.bf16.xpose.msra.mxu0 0
      %531 = vmatprep.subr.bf16.mxu0 0
      %532 = vmatpush1.bf16.xpose.msra.mxu0 0
      %533 = vmatprep.subr.bf16.mxu0 0
      %534 = vmatpush1.bf16.xpose.msra.mxu0 %v517
      %535 = vmatprep.subr.bf16.mxu0 0
      %536 = vmatpush2.bf16.xpose.msra.mxu0 0
      %537 = vmatprep.subr.bf16.mxu0 0
      %538 = vmatpush2.bf16.xpose.msra.mxu0 0
      %539 = vmatprep.subr.bf16.mxu0 0
      %540 = vmatpush2.bf16.xpose.msra.mxu0 0
      %541 = vmatprep.subr.bf16.mxu0 0
      %542 = vmatpush2.bf16.xpose.msra.mxu0 0
      %543 = vmatprep.subr.bf16.mxu0 0
      %544 = vmatpush2.bf16.xpose.msra.mxu0 0
      %545 = vmatprep.subr.bf16.mxu0 0
      %546 = vmatpush2.bf16.xpose.msra.mxu0 0
      %547 = vmatprep.subr.bf16.mxu0 0
      %548 = vmatpush2.bf16.xpose.msra.mxu0 0
      %549 = vmatprep.subr.bf16.mxu0 0
      %550 = vmatpush2.bf16.xpose.msra.mxu0 0
      %551 = vmatprep.mubr.bf16.mxu0 0
      %552 = vmatmul.mubr.bf16.gmra.mxu0 %v514
      %v553 = vpop.f32.mrf.mxu0
      %v554 = vadd.f32 0.0, %v553
      %v555 = vpop.f32.mrf.mxu0
      %v556 = vpop.f32.mrf.mxu0
      %v557 = vpop.f32.mrf.mxu0
      %558 = vdwg.mxu0
      %v559 = vsel %vm205, %v554, -inf
      %560 = vmax.xlane.f32.xlu0 %v559
      %v561 = vpop.xlane.xlu0 %560
      %v562 = vsub.f32 %v554, %v561
      %v563 = vmul.f32 %v562, 1.442695
      %v564 = vpow.pop %v563
      %v565 = vsel %vm205, %v564, 0.0
      %566 = vadd.xlane.f32.xlu0 %v565
      %v567 = vpop.xlane.xlu0 %566
      %v568 = vrcp.pop %v567
      %v569 = vmul.f32 %v564, %v568
      %v570 = vpack.c.bf16 %v569, %v569
      %571 = vrot.lane.b32.xlu0 %v154, 40
      %v572 = vpop.permute.xlu0 %571
      %v574 = vsel %vm220, %v570, 0
      %v577 = vand.u32 %v572, %v227
      %579 = vmatprep.subr.bf16.mxu0 0
      %580 = vmatpush1.bf16.msra.mxu0 0
      %581 = vmatprep.subr.bf16.mxu0 0
      %582 = vmatpush1.bf16.msra.mxu0 0
      %583 = vmatprep.subr.bf16.mxu0 0
      %584 = vmatpush1.bf16.msra.mxu0 0
      %585 = vmatprep.subr.bf16.mxu0 0
      %586 = vmatpush1.bf16.msra.mxu0 0
      %587 = vmatprep.subr.bf16.mxu0 0
      %588 = vmatpush1.bf16.msra.mxu0 0
      %589 = vmatprep.subr.bf16.mxu0 0
      %590 = vmatpush1.bf16.msra.mxu0 0
      %591 = vmatprep.subr.bf16.mxu0 0
      %592 = vmatpush1.bf16.msra.mxu0 0
      %593 = vmatprep.subr.bf16.mxu0 0
      %594 = vmatpush1.bf16.msra.mxu0 %v577
      %595 = vmatprep.subr.bf16.mxu0 0
      %596 = vmatpush2.bf16.msra.mxu0 0
      %597 = vmatprep.subr.bf16.mxu0 0
      %598 = vmatpush2.bf16.msra.mxu0 0
      %599 = vmatprep.subr.bf16.mxu0 0
      %600 = vmatpush2.bf16.msra.mxu0 0
      %601 = vmatprep.subr.bf16.mxu0 0
      %602 = vmatpush2.bf16.msra.mxu0 0
      %603 = vmatprep.subr.bf16.mxu0 0
      %604 = vmatpush2.bf16.msra.mxu0 0
      %605 = vmatprep.subr.bf16.mxu0 0
      %606 = vmatpush2.bf16.msra.mxu0 0
      %607 = vmatprep.subr.bf16.mxu0 0
      %608 = vmatpush2.bf16.msra.mxu0 0
      %609 = vmatprep.subr.bf16.mxu0 0
      %610 = vmatpush2.bf16.msra.mxu0 0
      %611 = vmatprep.mubr.bf16.mxu0 0
      %612 = vmatmul.mubr.bf16.gmra.mxu0 %v574
      %v613 = vpop.f32.mrf.mxu0
      %v614 = vadd.f32 0.0, %v613
      %v615 = vpop.f32.mrf.mxu0
      %v616 = vpop.f32.mrf.mxu0
      %v617 = vpop.f32.mrf.mxu0
      %618 = vdwg.mxu0
      %620 = vrot.lane.b32.xlu0 %v614, 24
      %v621 = vpop.permute.xlu0 %620
      %vm623 = vcmask 258240
      %624 = vst.msk [vmem:[%s145] sm:$0x1f] %vm623, %v621
      %v625 = vadd.f32 %v508, %v569
      %v626 = vmul.f32 %v625, 0.25
      %627 = vst.msk [vmem:[%s149] sm:$0x1f] %vm205, %v626
      %p628 = scmp.lt.s32.totalorder %s14, 1
      %s629 = scalar_select %p628, %s14, 1
      %s630 = smul.addr %s629, 8
      %s631 = scalar_lea.vmem %s1, %s630
      %p632 = scmp.lt.s32.totalorder %s14, 1
      %s633 = scalar_select %p632, %s14, 1
      %s634 = smul.addr %s633, 8
      %s635 = scalar_lea.vmem %s2, %s634
      // Predicated region
      $region25: #{_lambda_.16} parent=23 // pred_check
        %p636 = pneg %p58
      $region26: #{_lambda_.16} parent=23 // pred_check_branch
        %638 = sbr.rel (%p636) target = $region28
      $region27: #{_lambda_.16} parent=23 // pred_region
        _
      $region28: #{_lambda_.16} parent=23 // pred_fallthru
        _
      // Predicated region
      $region29: #{_lambda_.16} parent=23 // pred_check
        %p639 = pneg %p84
      $region30: #{_lambda_.16} parent=23 // pred_check_branch
        %641 = sbr.rel (%p639) target = $region32
      $region31: #{_lambda_.16} parent=23 // pred_region
        _
      $region32: #{_lambda_.16} parent=23 // pred_fallthru
        _
    $region24: #{_lambda_.16} parent=5 // pred_fallthru
      _
    %p642 = scmp.le.s32.totalorder 2, %s9
    // Predicated region
    $region33: #{_lambda_.16} parent=5 // pred_check
      %p643 = pneg %p642
    $region34: #{_lambda_.16} parent=5 // pred_check_branch
      %645 = sbr.rel (%p643) target = $region36
    $region35: #{_lambda_.16} parent=5 // pred_region
      %s646 = ssub.s32 %s9, 2
      // Predicated region
      $region37: #{_lambda_.16} parent=35 // pred_check
        %p647 = pneg %p64
      $region38: #{_lambda_.16} parent=35 // pred_check_branch
        %649 = sbr.rel (%p647) target = $region40
      $region39: #{_lambda_.16} parent=35 // pred_region
        %p650 = scmp.lt.s32.totalorder %s15, 1
        %s651 = scalar_select %p650, %s15, 1
        %s652 = smul.addr %s651, 8
        %s653 = scalar_lea.vmem %s1, %s652
      $region40: #{_lambda_.16} parent=35 // pred_fallthru
        _
      // Predicated region
      $region41: #{_lambda_.16} parent=35 // pred_check
        %p654 = pneg %p90
      $region42: #{_lambda_.16} parent=35 // pred_check_branch
        %656 = sbr.rel (%p654) target = $region44
      $region43: #{_lambda_.16} parent=35 // pred_region
        %p657 = scmp.lt.s32.totalorder %s15, 1
        %s658 = scalar_select %p657, %s15, 1
        %s659 = smul.addr %s658, 8
        %s660 = scalar_lea.vmem %s2, %s659
      $region44: #{_lambda_.16} parent=35 // pred_fallthru
        _
    $region36: #{_lambda_.16} parent=5 // pred_fallthru
      _
  $region6: #{_lambda_.16} parent=0 // loop_footer
    %s13 = sadd.s32 1, %s9
  $region7: #{_lambda_.16} parent=0 // loop_footer_branch
    %8 = sbr.rel target = $region3
  $region8: #{_lambda_.16} parent=0 // loop_exit
    _

// kernel: _lambda_.17
$region0: #{_lambda_.17}
  #allocation0 [shape = 'u32[]', space=smem, size = 0x4, offset = 0x4, fixed_abs, tag = 'smem constant byte address 0x4 - core index']
  #allocation1 [shape = 'u32[144,128]{1,0:T(1,128)}', space=vmem, size = 0x12000, scoped, tag = 'internal scratch']
  %s0 = inlined_call_operand.vmem [shape: f32[10,32], index: 0, kind: input, shape index: {}]
  %s1 = inlined_call_operand.vmem [shape: bf16[32,32], index: 1, kind: input, shape index: {}]
  %s2 = inlined_call_operand.vmem [shape: f32[1,32], index: 2, kind: input, shape index: {}]
  %s3 = inlined_call_operand.vmem [shape: f32[10,32], index: 3, kind: input, shape index: {}]
  %s4 = inlined_call_operand.vmem [shape: f32[10,32], index: 4, kind: output, shape index: {}]
  %s5 = sld [smem:[#allocation0]]
  $region26: #{_lambda_.17} parent=0
    _
  %s7 = ssub.s32 1, %s5
  %s8 = scalar_select 0, %s7, %s5
  // Predicated region
  $region2: #{_lambda_.17} parent=0 // pred_check
    _
  $region3: #{_lambda_.17} parent=0 // pred_check_branch
    %10 = sbr.rel (0) target = $region5
  $region4: #{_lambda_.17} parent=0 // pred_region
    _
  $region5: #{_lambda_.17} parent=0 // pred_fallthru
    _
  // Predicated region
  $region6: #{_lambda_.17} parent=0 // pred_check
    _
  $region7: #{_lambda_.17} parent=0 // pred_check_branch
    %12 = sbr.rel (0) target = $region9
  $region8: #{_lambda_.17} parent=0 // pred_region
    _
  $region9: #{_lambda_.17} parent=0 // pred_fallthru
    _
  // Predicated region
  $region10: #{_lambda_.17} parent=0 // pred_check
    _
  $region11: #{_lambda_.17} parent=0 // pred_check_branch
    %14 = sbr.rel (0) target = $region13
  $region12: #{_lambda_.17} parent=0 // pred_region
    _
  $region13: #{_lambda_.17} parent=0 // pred_fallthru
    _
  // Predicated region
  $region14: #{_lambda_.17} parent=0 // pred_check
    _
  $region15: #{_lambda_.17} parent=0 // pred_check_branch
    %16 = sbr.rel (0) target = $region17
  $region16: #{_lambda_.17} parent=0 // pred_region
    _
  $region17: #{_lambda_.17} parent=0 // pred_fallthru
    _
  %v18 = vld [vmem:[%s0] sm:$0xff]
  %v19 = vld [vmem:[%s0 + $0x8] sm:$0x3]
  %v20 = vpack.c.bf16 %v19, %v18
  %v21 = vld [vmem:[%s1] sm:$0xf]
  %v22 = vld [vmem:[%s1 + $0x4] sm:$0xf]
  %v23 = vld [vmem:[%s1 + $0x8] sm:$0xf]
  %v24 = vld [vmem:[%s1 + $0xc] sm:$0xf]
  %v25 = vld [vmem:[%s2] sm:$0x1]
  %v27 = vlaneseq
  %v28 = vshrl.u32 %v27, 7
  %v29 = vsub.s32 0, %v28
  %v30 = vrot.slane %v25, %v29
  %v36 = vunpack.c.l.b16 %v21
  %v37 = vunpack.c.l.b16 %v22
  %v38 = vunpack.c.l.b16 %v23
  %v39 = vunpack.c.l.b16 %v24
  %v40 = vpack.c.b16 %v37, %v36
  %v41 = vpack.c.b16 %v39, %v38
  %vm44 = vcmask 261120
  %v46 = vsel %vm44, %v20, 0
  %48 = vmatprep.subr.bf16.mxu0 0
  %49 = vmatpush1.bf16.msra.mxu0 0
  %50 = vmatprep.subr.bf16.mxu0 0
  %51 = vmatpush1.bf16.msra.mxu0 0
  %52 = vmatprep.subr.bf16.mxu0 0
  %53 = vmatpush1.bf16.msra.mxu0 0
  %54 = vmatprep.subr.bf16.mxu0 0
  %55 = vmatpush1.bf16.msra.mxu0 0
  %56 = vmatprep.subr.bf16.mxu0 0
  %57 = vmatpush1.bf16.msra.mxu0 0
  %58 = vmatprep.subr.bf16.mxu0 0
  %59 = vmatpush1.bf16.msra.mxu0 0
  %60 = vmatprep.subr.bf16.mxu0 0
  %61 = vmatpush1.bf16.msra.mxu0 %v41
  %62 = vmatprep.subr.bf16.mxu0 0
  %63 = vmatpush1.bf16.msra.mxu0 %v40
  %64 = vmatprep.subr.bf16.mxu0 0
  %65 = vmatpush2.bf16.msra.mxu0 0
  %66 = vmatprep.subr.bf16.mxu0 0
  %67 = vmatpush2.bf16.msra.mxu0 0
  %68 = vmatprep.subr.bf16.mxu0 0
  %69 = vmatpush2.bf16.msra.mxu0 0
  %70 = vmatprep.subr.bf16.mxu0 0
  %71 = vmatpush2.bf16.msra.mxu0 0
  %72 = vmatprep.subr.bf16.mxu0 0
  %73 = vmatpush2.bf16.msra.mxu0 0
  %74 = vmatprep.subr.bf16.mxu0 0
  %75 = vmatpush2.bf16.msra.mxu0 0
  %76 = vmatprep.subr.bf16.mxu0 0
  %77 = vmatpush2.bf16.msra.mxu0 0
  %78 = vmatprep.subr.bf16.mxu0 0
  %79 = vmatpush2.bf16.msra.mxu0 0
  %80 = vmatprep.mubr.bf16.mxu0 0
  %81 = vmatmul.mubr.bf16.gmra.mxu0 %v46
  %v82 = vpop.f32.mrf.mxu0
  %v83 = vadd.f32 %v30, %v82
  %v84 = vpop.f32.mrf.mxu0
  %v85 = vpop.f32.mrf.mxu0
  %v86 = vadd.f32 %v30, %v85
  %v87 = vpop.f32.mrf.mxu0
  %88 = vdwg.mxu0
  %v89 = vld [vmem:[%s3] sm:$0xff]
  %v90 = vld [vmem:[%s3 + $0x8] sm:$0x3]
  %v91 = vadd.f32 %v83, %v89
  %v92 = vadd.f32 %v86, %v90
  %93 = vst.msk [vmem:[%s4] sm:$0xff] %vm44, %v91
  %vm94 = vcmask 254976
  %95 = vst.msk [vmem:[%s4 + $0x8] sm:$0x3] %vm94, %v92
  // Predicated region
  $region18: #{_lambda_.17} parent=0 // pred_check
    _
  $region19: #{_lambda_.17} parent=0 // pred_check_branch
    %97 = sbr.rel (0) target = $region21
  $region20: #{_lambda_.17} parent=0 // pred_region
    _
  $region21: #{_lambda_.17} parent=0 // pred_fallthru
    _
  // Predicated region
  $region22: #{_lambda_.17} parent=0 // pred_check
    _
  $region23: #{_lambda_.17} parent=0 // pred_check_branch
    %99 = sbr.rel (0) target = $region25
  $region24: #{_lambda_.17} parent=0 // pred_region
    _
  $region25: #{_lambda_.17} parent=0 // pred_fallthru
    _

// kernel: _lambda_.18
$region0: #{_lambda_.18}
  #allocation0 [shape = 'u32[]', space=smem, size = 0x4, offset = 0x4, fixed_abs, tag = 'smem constant byte address 0x4 - core index']
  #allocation1 [shape = 'u32[144,128]{1,0:T(1,128)}', space=vmem, size = 0x12000, scoped, tag = 'internal scratch']
  %s0 = inlined_call_operand.vmem [shape: f32[10,32], index: 0, kind: input, shape index: {}]
  %s1 = inlined_call_operand.vmem [shape: bf16[32,128], index: 1, kind: input, shape index: {}]
  %s2 = inlined_call_operand.vmem [shape: f32[1,128], index: 2, kind: input, shape index: {}]
  %s3 = inlined_call_operand.vmem [shape: f32[1,32], index: 3, kind: input, shape index: {}]
  %s4 = inlined_call_operand.vmem [shape: f32[1,32], index: 4, kind: input, shape index: {}]
  %s5 = inlined_call_operand.vmem [shape: f32[10,128], index: 5, kind: output, shape index: {}]
  %s6 = sld [smem:[#allocation0]]
  $region30: #{_lambda_.18} parent=0
    _
  %s8 = ssub.s32 1, %s6
  %s9 = scalar_select 0, %s8, %s6
  // Predicated region
  $region2: #{_lambda_.18} parent=0 // pred_check
    _
  $region3: #{_lambda_.18} parent=0 // pred_check_branch
    %11 = sbr.rel (0) target = $region5
  $region4: #{_lambda_.18} parent=0 // pred_region
    _
  $region5: #{_lambda_.18} parent=0 // pred_fallthru
    _
  // Predicated region
  $region6: #{_lambda_.18} parent=0 // pred_check
    _
  $region7: #{_lambda_.18} parent=0 // pred_check_branch
    %13 = sbr.rel (0) target = $region9
  $region8: #{_lambda_.18} parent=0 // pred_region
    _
  $region9: #{_lambda_.18} parent=0 // pred_fallthru
    _
  // Predicated region
  $region10: #{_lambda_.18} parent=0 // pred_check
    _
  $region11: #{_lambda_.18} parent=0 // pred_check_branch
    %15 = sbr.rel (0) target = $region13
  $region12: #{_lambda_.18} parent=0 // pred_region
    _
  $region13: #{_lambda_.18} parent=0 // pred_fallthru
    _
  // Predicated region
  $region14: #{_lambda_.18} parent=0 // pred_check
    _
  $region15: #{_lambda_.18} parent=0 // pred_check_branch
    %17 = sbr.rel (0) target = $region17
  $region16: #{_lambda_.18} parent=0 // pred_region
    _
  $region17: #{_lambda_.18} parent=0 // pred_fallthru
    _
  // Predicated region
  $region18: #{_lambda_.18} parent=0 // pred_check
    _
  $region19: #{_lambda_.18} parent=0 // pred_check_branch
    %19 = sbr.rel (0) target = $region21
  $region20: #{_lambda_.18} parent=0 // pred_region
    _
  $region21: #{_lambda_.18} parent=0 // pred_fallthru
    _
  %v21 = vld [vmem:[%s0] sm:$0xff]
  %v22 = vld [vmem:[%s0 + $0x8] sm:$0x3]
  %vm23 = vcmask 261120
  %v24 = vsel %vm23, %v21, 0.0
  %25 = vadd.xlane.f32.xlu0 %v24
  %v26 = vpop.xlane.xlu0 %25
  %vm27 = vcmask 254976
  %v28 = vsel %vm27, %v22, 0.0
  %29 = vadd.xlane.f32.xlu0 %v28
  %v30 = vpop.xlane.xlu0 %29
  %v31 = vrcp.pop 32.0
  %v32 = vmul.f32 %v26, %v31
  %v33 = vmul.f32 %v30, %v31
  %v34 = vsub.f32 %v21, %v32
  %v35 = vsub.f32 %v22, %v33
  %v36 = vmul.f32 %v34, %v34
  %v37 = vmul.f32 %v35, %v35
  %v38 = vsel %vm23, %v36, 0.0
  %39 = vadd.xlane.f32.xlu0 %v38
  %v40 = vpop.xlane.xlu0 %39
  %v41 = vsel %vm27, %v37, 0.0
  %42 = vadd.xlane.f32.xlu0 %v41
  %v43 = vpop.xlane.xlu0 %42
  %v44 = vmul.f32 %v40, %v31
  %v45 = vmul.f32 %v43, %v31
  %v46 = vadd.f32 %v44, 1e-05
  %v47 = vadd.f32 %v45, 1e-05
  %v48 = vrsqrt.pop %v46
  %v49 = vrsqrt.pop %v47
  %v50 = vmul.f32 %v34, %v48
  %v51 = vmul.f32 %v35, %v49
  %v52 = vld [vmem:[%s3] sm:$0x1]
  %v54 = vlaneseq
  %v55 = vshrl.u32 %v54, 7
  %v56 = vsub.s32 0, %v55
  %v57 = vrot.slane %v52, %v56
  %v59 = vmul.f32 %v50, %v57
  %v60 = vmul.f32 %v51, %v57
  %v61 = vld [vmem:[%s4] sm:$0x1]
  %v63 = vlaneseq
  %v64 = vshrl.u32 %v63, 7
  %v65 = vsub.s32 0, %v64
  %v66 = vrot.slane %v61, %v65
  %v68 = vadd.f32 %v59, %v66
  %v69 = vadd.f32 %v60, %v66
  %v70 = vpack.c.bf16 %v69, %v68
  %v71 = vld [vmem:[%s1] sm:$0xf]
  %v72 = vld [vmem:[%s1 + $0x4] sm:$0xf]
  %v73 = vld [vmem:[%s1 + $0x8] sm:$0xf]
  %v74 = vld [vmem:[%s1 + $0xc] sm:$0xf]
  %v75 = vld [vmem:[%s2] sm:$0x1]
  %v77 = vlaneseq
  %v78 = vshrl.u32 %v77, 7
  %v79 = vsub.s32 0, %v78
  %v80 = vrot.slane %v75, %v79
  %v86 = vunpack.c.l.b16 %v71
  %v87 = vunpack.c.l.b16 %v72
  %v88 = vunpack.c.l.b16 %v73
  %v89 = vunpack.c.l.b16 %v74
  %v90 = vpack.c.b16 %v87, %v86
  %v91 = vpack.c.b16 %v89, %v88
  %v95 = vsel %vm23, %v70, 0
  %97 = vmatprep.subr.bf16.mxu0 0
  %98 = vmatpush1.bf16.msra.mxu0 0
  %99 = vmatprep.subr.bf16.mxu0 0
  %100 = vmatpush1.bf16.msra.mxu0 0
  %101 = vmatprep.subr.bf16.mxu0 0
  %102 = vmatpush1.bf16.msra.mxu0 0
  %103 = vmatprep.subr.bf16.mxu0 0
  %104 = vmatpush1.bf16.msra.mxu0 0
  %105 = vmatprep.subr.bf16.mxu0 0
  %106 = vmatpush1.bf16.msra.mxu0 0
  %107 = vmatprep.subr.bf16.mxu0 0
  %108 = vmatpush1.bf16.msra.mxu0 0
  %109 = vmatprep.subr.bf16.mxu0 0
  %110 = vmatpush1.bf16.msra.mxu0 %v91
  %111 = vmatprep.subr.bf16.mxu0 0
  %112 = vmatpush1.bf16.msra.mxu0 %v90
  %113 = vmatprep.subr.bf16.mxu0 0
  %114 = vmatpush2.bf16.msra.mxu0 0
  %115 = vmatprep.subr.bf16.mxu0 0
  %116 = vmatpush2.bf16.msra.mxu0 0
  %117 = vmatprep.subr.bf16.mxu0 0
  %118 = vmatpush2.bf16.msra.mxu0 0
  %119 = vmatprep.subr.bf16.mxu0 0
  %120 = vmatpush2.bf16.msra.mxu0 0
  %121 = vmatprep.subr.bf16.mxu0 0
  %122 = vmatpush2.bf16.msra.mxu0 0
  %123 = vmatprep.subr.bf16.mxu0 0
  %124 = vmatpush2.bf16.msra.mxu0 0
  %125 = vmatprep.subr.bf16.mxu0 0
  %126 = vmatpush2.bf16.msra.mxu0 0
  %127 = vmatprep.subr.bf16.mxu0 0
  %128 = vmatpush2.bf16.msra.mxu0 0
  %129 = vmatprep.mubr.bf16.mxu0 0
  %130 = vmatmul.mubr.bf16.gmra.mxu0 %v95
  %v131 = vpop.f32.mrf.mxu0
  %v132 = vadd.f32 %v80, %v131
  %v133 = vpop.f32.mrf.mxu0
  %v134 = vpop.f32.mrf.mxu0
  %v135 = vadd.f32 %v80, %v134
  %v136 = vpop.f32.mrf.mxu0
  %137 = vdwg.mxu0
  %v138 = vmul.f32 %v132, 1.702
  %v139 = vmul.f32 %v135, 1.702
  %v140 = vxor.u32 %v138, 2147483648
  %v141 = vxor.u32 %v139, 2147483648
  %v142 = vmul.f32 %v140, 1.442695
  %v143 = vpow.pop %v142
  %v144 = vmul.f32 %v141, 1.442695
  %v145 = vpow.pop %v144
  %v146 = vadd.f32 %v143, 1.0
  %v147 = vadd.f32 %v145, 1.0
  %v148 = vrcp.pop %v146
  %v149 = vmul.f32 1.0, %v148
  %v150 = vrcp.pop %v147
  %v151 = vmul.f32 1.0, %v150
  %v152 = vmul.f32 %v132, %v149
  %v153 = vmul.f32 %v135, %v151
  %154 = vst [vmem:[%s5] sm:$0xff] %v152
  %155 = vst [vmem:[%s5 + $0x8] sm:$0x3] %v153
  // Predicated region
  $region22: #{_lambda_.18} parent=0 // pred_check
    _
  $region23: #{_lambda_.18} parent=0 // pred_check_branch
    %157 = sbr.rel (0) target = $region25
  $region24: #{_lambda_.18} parent=0 // pred_region
    _
  $region25: #{_lambda_.18} parent=0 // pred_fallthru
    _
  // Predicated region
  $region26: #{_lambda_.18} parent=0 // pred_check
    _
  $region27: #{_lambda_.18} parent=0 // pred_check_branch
    %159 = sbr.rel (0) target = $region29
  $region28: #{_lambda_.18} parent=0 // pred_region
    _
  $region29: #{_lambda_.18} parent=0 // pred_fallthru
    _

// kernel: _lambda_.19
$region0: #{_lambda_.19}
  #allocation0 [shape = 'u32[]', space=smem, size = 0x4, offset = 0x4, fixed_abs, tag = 'smem constant byte address 0x4 - core index']
  #allocation1 [shape = 'u32[144,128]{1,0:T(1,128)}', space=vmem, size = 0x12000, scoped, tag = 'internal scratch']
  %s0 = inlined_call_operand.vmem [shape: f32[10,128], index: 0, kind: input, shape index: {}]
  %s1 = inlined_call_operand.vmem [shape: bf16[128,32], index: 1, kind: input, shape index: {}]
  %s2 = inlined_call_operand.vmem [shape: f32[1,32], index: 2, kind: input, shape index: {}]
  %s3 = inlined_call_operand.vmem [shape: f32[10,32], index: 3, kind: input, shape index: {}]
  %s4 = inlined_call_operand.vmem [shape: f32[10,32], index: 4, kind: output, shape index: {}]
  %s5 = sld [smem:[#allocation0]]
  $region26: #{_lambda_.19} parent=0
    _
  %s7 = ssub.s32 1, %s5
  %s8 = scalar_select 0, %s7, %s5
  // Predicated region
  $region2: #{_lambda_.19} parent=0 // pred_check
    _
  $region3: #{_lambda_.19} parent=0 // pred_check_branch
    %10 = sbr.rel (0) target = $region5
  $region4: #{_lambda_.19} parent=0 // pred_region
    _
  $region5: #{_lambda_.19} parent=0 // pred_fallthru
    _
  // Predicated region
  $region6: #{_lambda_.19} parent=0 // pred_check
    _
  $region7: #{_lambda_.19} parent=0 // pred_check_branch
    %12 = sbr.rel (0) target = $region9
  $region8: #{_lambda_.19} parent=0 // pred_region
    _
  $region9: #{_lambda_.19} parent=0 // pred_fallthru
    _
  // Predicated region
  $region10: #{_lambda_.19} parent=0 // pred_check
    _
  $region11: #{_lambda_.19} parent=0 // pred_check_branch
    %14 = sbr.rel (0) target = $region13
  $region12: #{_lambda_.19} parent=0 // pred_region
    _
  $region13: #{_lambda_.19} parent=0 // pred_fallthru
    _
  // Predicated region
  $region14: #{_lambda_.19} parent=0 // pred_check
    _
  $region15: #{_lambda_.19} parent=0 // pred_check_branch
    %16 = sbr.rel (0) target = $region17
  $region16: #{_lambda_.19} parent=0 // pred_region
    _
  $region17: #{_lambda_.19} parent=0 // pred_fallthru
    _
  %v18 = vld [vmem:[%s0] sm:$0xff]
  %v19 = vld [vmem:[%s0 + $0x8] sm:$0x3]
  %v20 = vpack.c.bf16 %v19, %v18
  %v21 = vld [vmem:[%s1] sm:$0xf]
  %v22 = vld [vmem:[%s1 + $0x4] sm:$0xf]
  %v23 = vld [vmem:[%s1 + $0x8] sm:$0xf]
  %v24 = vld [vmem:[%s1 + $0xc] sm:$0xf]
  %v25 = vld [vmem:[%s1 + $0x10] sm:$0xf]
  %v26 = vld [vmem:[%s1 + $0x14] sm:$0xf]
  %v27 = vld [vmem:[%s1 + $0x18] sm:$0xf]
  %v28 = vld [vmem:[%s1 + $0x1c] sm:$0xf]
  %v29 = vld [vmem:[%s1 + $0x20] sm:$0xf]
  %v30 = vld [vmem:[%s1 + $0x24] sm:$0xf]
  %v31 = vld [vmem:[%s1 + $0x28] sm:$0xf]
  %v32 = vld [vmem:[%s1 + $0x2c] sm:$0xf]
  %v33 = vld [vmem:[%s1 + $0x30] sm:$0xf]
  %v34 = vld [vmem:[%s1 + $0x34] sm:$0xf]
  %v35 = vld [vmem:[%s1 + $0x38] sm:$0xf]
  %v36 = vld [vmem:[%s1 + $0x3c] sm:$0xf]
  %v37 = vld [vmem:[%s2] sm:$0x1]
  %v39 = vlaneseq
  %v40 = vshrl.u32 %v39, 7
  %v41 = vsub.s32 0, %v40
  %v42 = vrot.slane %v37, %v41
  %v60 = vunpack.c.l.b16 %v21
  %v61 = vunpack.c.l.b16 %v22
  %v62 = vunpack.c.l.b16 %v23
  %v63 = vunpack.c.l.b16 %v24
  %v64 = vunpack.c.l.b16 %v25
  %v65 = vunpack.c.l.b16 %v26
  %v66 = vunpack.c.l.b16 %v27
  %v67 = vunpack.c.l.b16 %v28
  %v68 = vunpack.c.l.b16 %v29
  %v69 = vunpack.c.l.b16 %v30
  %v70 = vunpack.c.l.b16 %v31
  %v71 = vunpack.c.l.b16 %v32
  %v72 = vunpack.c.l.b16 %v33
  %v73 = vunpack.c.l.b16 %v34
  %v74 = vunpack.c.l.b16 %v35
  %v75 = vunpack.c.l.b16 %v36
  %v76 = vpack.c.b16 %v61, %v60
  %v77 = vpack.c.b16 %v63, %v62
  %v78 = vpack.c.b16 %v65, %v64
  %v79 = vpack.c.b16 %v67, %v66
  %v80 = vpack.c.b16 %v69, %v68
  %v81 = vpack.c.b16 %v71, %v70
  %v82 = vpack.c.b16 %v73, %v72
  %v83 = vpack.c.b16 %v75, %v74
  %92 = vmatprep.subr.bf16.mxu0 0
  %93 = vmatpush1.bf16.msra.mxu0 %v83
  %94 = vmatprep.subr.bf16.mxu0 0
  %95 = vmatpush1.bf16.msra.mxu0 %v82
  %96 = vmatprep.subr.bf16.mxu0 0
  %97 = vmatpush1.bf16.msra.mxu0 %v81
  %98 = vmatprep.subr.bf16.mxu0 0
  %99 = vmatpush1.bf16.msra.mxu0 %v80
  %100 = vmatprep.subr.bf16.mxu0 0
  %101 = vmatpush1.bf16.msra.mxu0 %v79
  %102 = vmatprep.subr.bf16.mxu0 0
  %103 = vmatpush1.bf16.msra.mxu0 %v78
  %104 = vmatprep.subr.bf16.mxu0 0
  %105 = vmatpush1.bf16.msra.mxu0 %v77
  %106 = vmatprep.subr.bf16.mxu0 0
  %107 = vmatpush1.bf16.msra.mxu0 %v76
  %108 = vmatprep.subr.bf16.mxu0 0
  %109 = vmatpush2.bf16.msra.mxu0 0
  %110 = vmatprep.subr.bf16.mxu0 0
  %111 = vmatpush2.bf16.msra.mxu0 0
  %112 = vmatprep.subr.bf16.mxu0 0
  %113 = vmatpush2.bf16.msra.mxu0 0
  %114 = vmatprep.subr.bf16.mxu0 0
  %115 = vmatpush2.bf16.msra.mxu0 0
  %116 = vmatprep.subr.bf16.mxu0 0
  %117 = vmatpush2.bf16.msra.mxu0 0
  %118 = vmatprep.subr.bf16.mxu0 0
  %119 = vmatpush2.bf16.msra.mxu0 0
  %120 = vmatprep.subr.bf16.mxu0 0
  %121 = vmatpush2.bf16.msra.mxu0 0
  %122 = vmatprep.subr.bf16.mxu0 0
  %123 = vmatpush2.bf16.msra.mxu0 0
  %124 = vmatprep.mubr.bf16.mxu0 0
  %125 = vmatmul.mubr.bf16.gmra.mxu0 %v20
  %v126 = vpop.f32.mrf.mxu0
  %v127 = vadd.f32 %v42, %v126
  %v128 = vpop.f32.mrf.mxu0
  %v129 = vpop.f32.mrf.mxu0
  %v130 = vadd.f32 %v42, %v129
  %v131 = vpop.f32.mrf.mxu0
  %132 = vdwg.mxu0
  %v133 = vld [vmem:[%s3] sm:$0xff]
  %v134 = vld [vmem:[%s3 + $0x8] sm:$0x3]
  %v135 = vadd.f32 %v127, %v133
  %v136 = vadd.f32 %v130, %v134
  %vm137 = vcmask 261120
  %138 = vst.msk [vmem:[%s4] sm:$0xff] %vm137, %v135
  %vm139 = vcmask 254976
  %140 = vst.msk [vmem:[%s4 + $0x8] sm:$0x3] %vm139, %v136
  // Predicated region
  $region18: #{_lambda_.19} parent=0 // pred_check
    _
  $region19: #{_lambda_.19} parent=0 // pred_check_branch
    %142 = sbr.rel (0) target = $region21
  $region20: #{_lambda_.19} parent=0 // pred_region
    _
  $region21: #{_lambda_.19} parent=0 // pred_fallthru
    _
  // Predicated region
  $region22: #{_lambda_.19} parent=0 // pred_check
    _
  $region23: #{_lambda_.19} parent=0 // pred_check_branch
    %144 = sbr.rel (0) target = $region25
  $region24: #{_lambda_.19} parent=0 // pred_region
    _
  $region25: #{_lambda_.19} parent=0 // pred_fallthru
    _

// kernel: _lambda_.20
$region0: #{_lambda_.20}
  #allocation0 [shape = 'u32[]', space=smem, size = 0x4, offset = 0x4, fixed_abs, tag = 'smem constant byte address 0x4 - core index']
  #allocation1 [shape = 'u32[144,128]{1,0:T(1,128)}', space=vmem, size = 0x12000, scoped, tag = 'internal scratch']
  %s0 = inlined_call_operand.vmem [shape: f32[10,32], index: 0, kind: input, shape index: {}]
  %s1 = inlined_call_operand.vmem [shape: bf16[32,96], index: 1, kind: input, shape index: {}]
  %s2 = inlined_call_operand.vmem [shape: f32[1,96], index: 2, kind: input, shape index: {}]
  %s3 = inlined_call_operand.vmem [shape: f32[1,32], index: 3, kind: input, shape index: {}]
  %s4 = inlined_call_operand.vmem [shape: f32[1,32], index: 4, kind: input, shape index: {}]
  %s5 = inlined_call_operand.vmem [shape: f32[10,96], index: 5, kind: output, shape index: {0}]
  %s6 = inlined_call_operand.vmem [shape: f32[10,32], index: 6, kind: output, shape index: {1}]
  %7 = xla_tuple %s5, %s6
  %s8 = sld [smem:[#allocation0]]
  $region38: #{_lambda_.20} parent=0
    _
  %s10 = ssub.s32 1, %s8
  %s11 = scalar_select 0, %s10, %s8
  // Predicated region
  $region2: #{_lambda_.20} parent=0 // pred_check
    _
  $region3: #{_lambda_.20} parent=0 // pred_check_branch
    %13 = sbr.rel (0) target = $region5
  $region4: #{_lambda_.20} parent=0 // pred_region
    _
  $region5: #{_lambda_.20} parent=0 // pred_fallthru
    _
  // Predicated region
  $region6: #{_lambda_.20} parent=0 // pred_check
    _
  $region7: #{_lambda_.20} parent=0 // pred_check_branch
    %15 = sbr.rel (0) target = $region9
  $region8: #{_lambda_.20} parent=0 // pred_region
    _
  $region9: #{_lambda_.20} parent=0 // pred_fallthru
    _
  // Predicated region
  $region10: #{_lambda_.20} parent=0 // pred_check
    _
  $region11: #{_lambda_.20} parent=0 // pred_check_branch
    %17 = sbr.rel (0) target = $region13
  $region12: #{_lambda_.20} parent=0 // pred_region
    _
  $region13: #{_lambda_.20} parent=0 // pred_fallthru
    _
  // Predicated region
  $region14: #{_lambda_.20} parent=0 // pred_check
    _
  $region15: #{_lambda_.20} parent=0 // pred_check_branch
    %19 = sbr.rel (0) target = $region17
  $region16: #{_lambda_.20} parent=0 // pred_region
    _
  $region17: #{_lambda_.20} parent=0 // pred_fallthru
    _
  // Predicated region
  $region18: #{_lambda_.20} parent=0 // pred_check
    _
  $region19: #{_lambda_.20} parent=0 // pred_check_branch
    %21 = sbr.rel (0) target = $region21
  $region20: #{_lambda_.20} parent=0 // pred_region
    _
  $region21: #{_lambda_.20} parent=0 // pred_fallthru
    _
  %v23 = vld [vmem:[%s0] sm:$0xff]
  %v24 = vld [vmem:[%s0 + $0x8] sm:$0x3]
  %vm25 = vcmask 261120
  %v26 = vsel %vm25, %v23, 0.0
  %27 = vadd.xlane.f32.xlu0 %v26
  %v28 = vpop.xlane.xlu0 %27
  %vm29 = vcmask 254976
  %v30 = vsel %vm29, %v24, 0.0
  %31 = vadd.xlane.f32.xlu0 %v30
  %v32 = vpop.xlane.xlu0 %31
  %v33 = vrcp.pop 32.0
  %v34 = vmul.f32 %v28, %v33
  %v35 = vmul.f32 %v32, %v33
  %v36 = vsub.f32 %v23, %v34
  %v37 = vsub.f32 %v24, %v35
  %v38 = vmul.f32 %v36, %v36
  %v39 = vmul.f32 %v37, %v37
  %v40 = vsel %vm25, %v38, 0.0
  %41 = vadd.xlane.f32.xlu0 %v40
  %v42 = vpop.xlane.xlu0 %41
  %v43 = vsel %vm29, %v39, 0.0
  %44 = vadd.xlane.f32.xlu0 %v43
  %v45 = vpop.xlane.xlu0 %44
  %v46 = vmul.f32 %v42, %v33
  %v47 = vmul.f32 %v45, %v33
  %v48 = vadd.f32 %v46, 1e-05
  %v49 = vadd.f32 %v47, 1e-05
  %v50 = vrsqrt.pop %v48
  %v51 = vrsqrt.pop %v49
  %v52 = vmul.f32 %v36, %v50
  %v53 = vmul.f32 %v37, %v51
  %v54 = vld [vmem:[%s3] sm:$0x1]
  %v56 = vlaneseq
  %v57 = vshrl.u32 %v56, 7
  %v58 = vsub.s32 0, %v57
  %v59 = vrot.slane %v54, %v58
  %v61 = vmul.f32 %v52, %v59
  %v62 = vmul.f32 %v53, %v59
  %v63 = vld [vmem:[%s4] sm:$0x1]
  %v65 = vlaneseq
  %v66 = vshrl.u32 %v65, 7
  %v67 = vsub.s32 0, %v66
  %v68 = vrot.slane %v63, %v67
  %v70 = vadd.f32 %v61, %v68
  %v71 = vadd.f32 %v62, %v68
  %72 = vst.msk [vmem:[%s6] sm:$0xff] %vm25, %v70
  %73 = vst.msk [vmem:[%s6 + $0x8] sm:$0x3] %vm29, %v71
  %v74 = vpack.c.bf16 %v71, %v70
  %v75 = vld [vmem:[%s1] sm:$0xf]
  %v76 = vld [vmem:[%s1 + $0x4] sm:$0xf]
  %v77 = vld [vmem:[%s1 + $0x8] sm:$0xf]
  %v78 = vld [vmem:[%s1 + $0xc] sm:$0xf]
  %v79 = vld [vmem:[%s2] sm:$0x1]
  %v81 = vlaneseq
  %v82 = vshrl.u32 %v81, 7
  %v83 = vsub.s32 0, %v82
  %v84 = vrot.slane %v79, %v83
  %v90 = vunpack.c.l.b16 %v75
  %v91 = vunpack.c.l.b16 %v76
  %v92 = vunpack.c.l.b16 %v77
  %v93 = vunpack.c.l.b16 %v78
  %v94 = vpack.c.b16 %v91, %v90
  %v95 = vpack.c.b16 %v93, %v92
  %v99 = vsel %vm25, %v74, 0
  %101 = vmatprep.subr.bf16.mxu0 0
  %102 = vmatpush1.bf16.msra.mxu0 0
  %103 = vmatprep.subr.bf16.mxu0 0
  %104 = vmatpush1.bf16.msra.mxu0 0
  %105 = vmatprep.subr.bf16.mxu0 0
  %106 = vmatpush1.bf16.msra.mxu0 0
  %107 = vmatprep.subr.bf16.mxu0 0
  %108 = vmatpush1.bf16.msra.mxu0 0
  %109 = vmatprep.subr.bf16.mxu0 0
  %110 = vmatpush1.bf16.msra.mxu0 0
  %111 = vmatprep.subr.bf16.mxu0 0
  %112 = vmatpush1.bf16.msra.mxu0 0
  %113 = vmatprep.subr.bf16.mxu0 0
  %114 = vmatpush1.bf16.msra.mxu0 %v95
  %115 = vmatprep.subr.bf16.mxu0 0
  %116 = vmatpush1.bf16.msra.mxu0 %v94
  %117 = vmatprep.subr.bf16.mxu0 0
  %118 = vmatpush2.bf16.msra.mxu0 0
  %119 = vmatprep.subr.bf16.mxu0 0
  %120 = vmatpush2.bf16.msra.mxu0 0
  %121 = vmatprep.subr.bf16.mxu0 0
  %122 = vmatpush2.bf16.msra.mxu0 0
  %123 = vmatprep.subr.bf16.mxu0 0
  %124 = vmatpush2.bf16.msra.mxu0 0
  %125 = vmatprep.subr.bf16.mxu0 0
  %126 = vmatpush2.bf16.msra.mxu0 0
  %127 = vmatprep.subr.bf16.mxu0 0
  %128 = vmatpush2.bf16.msra.mxu0 0
  %129 = vmatprep.subr.bf16.mxu0 0
  %130 = vmatpush2.bf16.msra.mxu0 0
  %131 = vmatprep.subr.bf16.mxu0 0
  %132 = vmatpush2.bf16.msra.mxu0 0
  %133 = vmatprep.mubr.bf16.mxu0 0
  %134 = vmatmul.mubr.bf16.gmra.mxu0 %v99
  %v135 = vpop.f32.mrf.mxu0
  %v136 = vadd.f32 %v84, %v135
  %v137 = vpop.f32.mrf.mxu0
  %v138 = vpop.f32.mrf.mxu0
  %v139 = vadd.f32 %v84, %v138
  %v140 = vpop.f32.mrf.mxu0
  %141 = vdwg.mxu0
  %vm142 = vcmask 785408
  %143 = vst.msk [vmem:[%s5] sm:$0xff] %vm142, %v136
  %vm144 = vcmask 779264
  %145 = vst.msk [vmem:[%s5 + $0x8] sm:$0x3] %vm144, %v139
  // Predicated region
  $region22: #{_lambda_.20} parent=0 // pred_check
    _
  $region23: #{_lambda_.20} parent=0 // pred_check_branch
    %147 = sbr.rel (0) target = $region25
  $region24: #{_lambda_.20} parent=0 // pred_region
    _
  $region25: #{_lambda_.20} parent=0 // pred_fallthru
    _
  // Predicated region
  $region26: #{_lambda_.20} parent=0 // pred_check
    _
  $region27: #{_lambda_.20} parent=0 // pred_check_branch
    %149 = sbr.rel (0) target = $region29
  $region28: #{_lambda_.20} parent=0 // pred_region
    _
  $region29: #{_lambda_.20} parent=0 // pred_fallthru
    _
  // Predicated region
  $region30: #{_lambda_.20} parent=0 // pred_check
    _
  $region31: #{_lambda_.20} parent=0 // pred_check_branch
    %151 = sbr.rel (0) target = $region33
  $region32: #{_lambda_.20} parent=0 // pred_region
    _
  $region33: #{_lambda_.20} parent=0 // pred_fallthru
    _
  // Predicated region
  $region34: #{_lambda_.20} parent=0 // pred_check
    _
  $region35: #{_lambda_.20} parent=0 // pred_check_branch
    %153 = sbr.rel (0) target = $region37
  $region36: #{_lambda_.20} parent=0 // pred_region
    _
  $region37: #{_lambda_.20} parent=0 // pred_fallthru
    _

// kernel: _lambda_.25
$region0: #{_lambda_.25}
  #allocation0 [shape = 'u32[]', space=smem, size = 0x4, offset = 0x4, fixed_abs, tag = 'smem constant byte address 0x4 - core index']
  #allocation1 [shape = 'u32[144,128]{1,0:T(1,128)}', space=vmem, size = 0x12000, scoped, tag = 'internal scratch']
  %s0 = inlined_call_operand.vmem [shape: f32[10,32], index: 0, kind: input, shape index: {}]
  %s1 = inlined_call_operand.vmem [shape: bf16[32,16], index: 1, kind: input, shape index: {}]
  %s2 = inlined_call_operand.vmem [shape: f32[1,32], index: 2, kind: input, shape index: {}]
  %s3 = inlined_call_operand.vmem [shape: f32[1,32], index: 3, kind: input, shape index: {}]
  %s4 = inlined_call_operand.vmem [shape: f32[10,16], index: 4, kind: output, shape index: {}]
  %s5 = sld [smem:[#allocation0]]
  $region26: #{_lambda_.25} parent=0
    _
  %s7 = ssub.s32 1, %s5
  %s8 = scalar_select 0, %s7, %s5
  // Predicated region
  $region2: #{_lambda_.25} parent=0 // pred_check
    _
  $region3: #{_lambda_.25} parent=0 // pred_check_branch
    %10 = sbr.rel (0) target = $region5
  $region4: #{_lambda_.25} parent=0 // pred_region
    _
  $region5: #{_lambda_.25} parent=0 // pred_fallthru
    _
  // Predicated region
  $region6: #{_lambda_.25} parent=0 // pred_check
    _
  $region7: #{_lambda_.25} parent=0 // pred_check_branch
    %12 = sbr.rel (0) target = $region9
  $region8: #{_lambda_.25} parent=0 // pred_region
    _
  $region9: #{_lambda_.25} parent=0 // pred_fallthru
    _
  // Predicated region
  $region10: #{_lambda_.25} parent=0 // pred_check
    _
  $region11: #{_lambda_.25} parent=0 // pred_check_branch
    %14 = sbr.rel (0) target = $region13
  $region12: #{_lambda_.25} parent=0 // pred_region
    _
  $region13: #{_lambda_.25} parent=0 // pred_fallthru
    _
  // Predicated region
  $region14: #{_lambda_.25} parent=0 // pred_check
    _
  $region15: #{_lambda_.25} parent=0 // pred_check_branch
    %16 = sbr.rel (0) target = $region17
  $region16: #{_lambda_.25} parent=0 // pred_region
    _
  $region17: #{_lambda_.25} parent=0 // pred_fallthru
    _
  %v18 = vld [vmem:[%s0] sm:$0xff]
  %v19 = vld [vmem:[%s0 + $0x8] sm:$0x3]
  %vm20 = vcmask 261120
  %v21 = vsel %vm20, %v18, 0.0
  %22 = vadd.xlane.f32.xlu0 %v21
  %v23 = vpop.xlane.xlu0 %22
  %vm24 = vcmask 254976
  %v25 = vsel %vm24, %v19, 0.0
  %26 = vadd.xlane.f32.xlu0 %v25
  %v27 = vpop.xlane.xlu0 %26
  %v28 = vrcp.pop 32.0
  %v29 = vmul.f32 %v23, %v28
  %v30 = vmul.f32 %v27, %v28
  %v31 = vsub.f32 %v18, %v29
  %v32 = vsub.f32 %v19, %v30
  %v33 = vmul.f32 %v31, %v31
  %v34 = vmul.f32 %v32, %v32
  %v35 = vsel %vm20, %v33, 0.0
  %36 = vadd.xlane.f32.xlu0 %v35
  %v37 = vpop.xlane.xlu0 %36
  %v38 = vsel %vm24, %v34, 0.0
  %39 = vadd.xlane.f32.xlu0 %v38
  %v40 = vpop.xlane.xlu0 %39
  %v41 = vmul.f32 %v37, %v28
  %v42 = vmul.f32 %v40, %v28
  %v43 = vadd.f32 %v41, 1e-05
  %v44 = vadd.f32 %v42, 1e-05
  %v45 = vrsqrt.pop %v43
  %v46 = vrsqrt.pop %v44
  %v47 = vmul.f32 %v31, %v45
  %v48 = vmul.f32 %v32, %v46
  %v49 = vld [vmem:[%s2] sm:$0x1]
  %v51 = vlaneseq
  %v52 = vshrl.u32 %v51, 7
  %v53 = vsub.s32 0, %v52
  %v54 = vrot.slane %v49, %v53
  %v56 = vmul.f32 %v47, %v54
  %v57 = vmul.f32 %v48, %v54
  %v58 = vld [vmem:[%s3] sm:$0x1]
  %v60 = vlaneseq
  %v61 = vshrl.u32 %v60, 7
  %v62 = vsub.s32 0, %v61
  %v63 = vrot.slane %v58, %v62
  %v65 = vadd.f32 %v56, %v63
  %v66 = vadd.f32 %v57, %v63
  %v67 = vpack.c.bf16 %v66, %v65
  %v68 = vld [vmem:[%s1] sm:$0xf]
  %v69 = vld [vmem:[%s1 + $0x4] sm:$0xf]
  %v70 = vld [vmem:[%s1 + $0x8] sm:$0xf]
  %v71 = vld [vmem:[%s1 + $0xc] sm:$0xf]
  %v76 = vunpack.c.l.b16 %v68
  %v77 = vunpack.c.l.b16 %v69
  %v78 = vunpack.c.l.b16 %v70
  %v79 = vunpack.c.l.b16 %v71
  %v80 = vpack.c.b16 %v77, %v76
  %v81 = vpack.c.b16 %v79, %v78
  %v85 = vsel %vm20, %v67, 0
  %87 = vmatprep.subr.bf16.mxu0 0
  %88 = vmatpush1.bf16.msra.mxu0 0
  %89 = vmatprep.subr.bf16.mxu0 0
  %90 = vmatpush1.bf16.msra.mxu0 0
  %91 = vmatprep.subr.bf16.mxu0 0
  %92 = vmatpush1.bf16.msra.mxu0 0
  %93 = vmatprep.subr.bf16.mxu0 0
  %94 = vmatpush1.bf16.msra.mxu0 0
  %95 = vmatprep.subr.bf16.mxu0 0
  %96 = vmatpush1.bf16.msra.mxu0 0
  %97 = vmatprep.subr.bf16.mxu0 0
  %98 = vmatpush1.bf16.msra.mxu0 0
  %99 = vmatprep.subr.bf16.mxu0 0
  %100 = vmatpush1.bf16.msra.mxu0 %v81
  %101 = vmatprep.subr.bf16.mxu0 0
  %102 = vmatpush1.bf16.msra.mxu0 %v80
  %103 = vmatprep.subr.bf16.mxu0 0
  %104 = vmatpush2.bf16.msra.mxu0 0
  %105 = vmatprep.subr.bf16.mxu0 0
  %106 = vmatpush2.bf16.msra.mxu0 0
  %107 = vmatprep.subr.bf16.mxu0 0
  %108 = vmatpush2.bf16.msra.mxu0 0
  %109 = vmatprep.subr.bf16.mxu0 0
  %110 = vmatpush2.bf16.msra.mxu0 0
  %111 = vmatprep.subr.bf16.mxu0 0
  %112 = vmatpush2.bf16.msra.mxu0 0
  %113 = vmatprep.subr.bf16.mxu0 0
  %114 = vmatpush2.bf16.msra.mxu0 0
  %115 = vmatprep.subr.bf16.mxu0 0
  %116 = vmatpush2.bf16.msra.mxu0 0
  %117 = vmatprep.subr.bf16.mxu0 0
  %118 = vmatpush2.bf16.msra.mxu0 0
  %119 = vmatprep.mubr.bf16.mxu0 0
  %120 = vmatmul.mubr.bf16.gmra.mxu0 %v85
  %v121 = vpop.f32.mrf.mxu0
  %v122 = vadd.f32 0.0, %v121
  %v123 = vpop.f32.mrf.mxu0
  %v124 = vpop.f32.mrf.mxu0
  %v125 = vadd.f32 0.0, %v124
  %v126 = vpop.f32.mrf.mxu0
  %127 = vdwg.mxu0
  %vm128 = vcmask 130048
  %129 = vst.msk [vmem:[%s4] sm:$0xff] %vm128, %v122
  %vm130 = vcmask 123904
  %131 = vst.msk [vmem:[%s4 + $0x8] sm:$0x3] %vm130, %v125
  // Predicated region
  $region18: #{_lambda_.25} parent=0 // pred_check
    _
  $region19: #{_lambda_.25} parent=0 // pred_check_branch
    %133 = sbr.rel (0) target = $region21
  $region20: #{_lambda_.25} parent=0 // pred_region
    _
  $region21: #{_lambda_.25} parent=0 // pred_fallthru
    _
  // Predicated region
  $region22: #{_lambda_.25} parent=0 // pred_check
    _
  $region23: #{_lambda_.25} parent=0 // pred_check_branch
    %135 = sbr.rel (0) target = $region25
  $region24: #{_lambda_.25} parent=0 // pred_region
    _
  $region25: #{_lambda_.25} parent=0 // pred_fallthru
    _

</llo_original>
